<compile_context>
chip_gen: v7x
topology: tpu7x:2x2x1
jax: 0.10.0
libtpu: 0.0.40
codegen_flags: <defaults>
</compile_context>

<pallas_src>
import functools

import jax
import jax.numpy as jnp
import numpy as np
from jax import lax
from jax.experimental import pallas as pl
from jax.experimental.pallas import tpu as pltpu


def _rotation_hn_kernel(x_ref, phi_p_ref, mask_ref, out_ref, *,
                        temperature, lr, max_iter, tol, check_every):
    beta = temperature

    # Lane-dense layout: batch on lanes, the 2 coordinates on sublanes.
    x0 = x_ref[0:1, :]                       # (1, TB)
    x1 = x_ref[1:2, :]                       # (1, TB)

    # lr folded into the mask -> masked-out coordinates take an exact zero step.
    step0 = lr * mask_ref[0:1, :]            # (1, TB)
    step1 = lr * mask_ref[1:2, :]            # (1, TB)

    # Stored-pattern features: pattern index on sublanes, broadcast across lanes.
    pf1 = phi_p_ref[:, 0:1]                  # (n, 1)
    pf2 = phi_p_ref[:, 1:2]
    pf3 = phi_p_ref[:, 2:3]

    def one_step(x0, x1, s0, s1):
        x0sq = x0 * x0
        x1sq = x1 * x1
        x0x1 = x0 * x1

        # phi(x) rows, (1, TB)
        f1 = x0sq + x1sq
        f2 = x0sq * x1sq
        f3 = x0x1 * (x0sq - x1sq)            # x0^3*x1 - x0*x1^3

        # logits[j, b] = phi(x)_b . phi(p)_j   -> (n, TB) via broadcasting.
        # TODO(synk): for num_patterns >~ 256 switch logits / weighted sums to
        # MXU matmuls (phi_x @ phi_P^T and e @ [1 | pf]) instead of VPU broadcasts.
        z = beta * (f1 * pf1 + f2 * pf2 + f3 * pf3)
        z = z - jnp.max(z, axis=0, keepdims=True)
        e = jnp.exp(z)                       # (n, TB), kept f32 (v5e has no bf16 VPU/EUP)
        inv = 1.0 / jnp.sum(e, axis=0, keepdims=True)   # (1, TB)

        # dE/dphi(x) = phi(x) - softmax @ phi(P)  (normalization folded in via inv)
        g1 = f1 - inv * jnp.sum(e * pf1, axis=0, keepdims=True)
        g2 = f2 - inv * jnp.sum(e * pf2, axis=0, keepdims=True)
        g3 = f3 - inv * jnp.sum(e * pf3, axis=0, keepdims=True)

        # Chain rule through the feature map: dE/dx = J_phi(x)^T dE/dphi(x)
        grad0 = (g1 * (2.0 * x0)
                 + g2 * (2.0 * x0 * x1sq)
                 + g3 * (3.0 * x0sq * x1 - x1sq * x1))
        grad1 = (g1 * (2.0 * x1)
                 + g2 * (2.0 * x0sq * x1)
                 + g3 * (x0sq * x0 - 3.0 * x0 * x1sq))

        return x0 - s0 * grad0, x1 - s1 * grad1

    K = max(1, check_every)
    num_blocks = max_iter // K
    rem = max_iter - num_blocks * K

    def block_body(_, carry):
        x0, x1, done = carry
        scale = 1.0 - done                   # 0.0 once this tile has converged -> frozen
        s0 = step0 * scale
        s1 = step1 * scale
        x0p, x1p = x0, x1
        for _k in range(K):                  # statically unrolled descent window
            x0p, x1p = x0, x1
            x0, x1 = one_step(x0, x1, s0, s1)
        # Single fused convergence reduce per block (last sub-step delta).
        max_delta = jnp.max(jnp.maximum(jnp.abs(x0 - x0p), jnp.abs(x1 - x1p)))
        done = jnp.maximum(done, (max_delta < tol).astype(jnp.float32))
        return x0, x1, done

    # TODO(synk): the torch loop breaks early; a fixed-trip fori_loop with a frozen
    # "done" gate reproduces the result (a lax.while_loop could skip the dead tail).
    done0 = jnp.zeros((), jnp.float32)
    x0, x1, done = lax.fori_loop(0, num_blocks, block_body, (x0, x1, done0))

    if rem:                                  # static remainder so total steps == max_iter
        scale = 1.0 - done
        s0 = step0 * scale
        s1 = step1 * scale
        for _k in range(rem):
            x0, x1 = one_step(x0, x1, s0, s1)

    # Lane-dense stores of the full (2, TB) slab (one row each, 128-lane wide).
    out_ref[0:1, :] = x0
    out_ref[1:2, :] = x1


def rotation_hopfield_forward(x, patterns, temperature=1.0, lr=0.01,
                              max_iter=1000, tol=1e-6, mask=None,
                              check_every=8, lane_tile=128):
    x = jnp.asarray(x, jnp.float32)
    patterns = jnp.asarray(patterns, jnp.float32)
    b = x.shape[0]
    if mask is None:
        mask_f = jnp.ones_like(x)
    else:
        mask_f = jnp.asarray(mask, jnp.float32)

    # Rotation-invariant features of the stored patterns (computed once, tiny).
    p0 = patterns[:, 0]
    p1 = patterns[:, 1]
    phi_p = jnp.stack((p0 * p0 + p1 * p1,
                       (p0 * p0) * (p1 * p1),
                       p0 ** 3 * p1 - p0 * p1 ** 3), axis=1)        # (n, 3)

    # Lane-dense (2, batch) layout, batch padded to a multiple of the lane tile.
    TB = lane_tile
    b_pad = ((b + TB - 1) // TB) * TB
    x_t = jnp.zeros((2, b_pad), jnp.float32).at[:, :b].set(x.T)
    m_t = jnp.zeros((2, b_pad), jnp.float32).at[:, :b].set(mask_f.T)  # pad lanes masked out

    kernel = functools.partial(
        _rotation_hn_kernel,
        temperature=float(temperature), lr=float(lr),
        max_iter=int(max_iter), tol=float(tol), check_every=int(check_every))

    out_t = pl.pallas_call(
        kernel,
        out_shape=jax.ShapeDtypeStruct((2, b_pad), jnp.float32),
        grid=(b_pad // TB,),
        in_specs=[
            pl.BlockSpec((2, TB), lambda i: (0, i)),
            pl.BlockSpec(tuple(phi_p.shape), lambda i: (0, 0)),
            pl.BlockSpec((2, TB), lambda i: (0, i)),
        ],
        out_specs=pl.BlockSpec((2, TB), lambda i: (0, i)),
        compiler_params=pltpu.CompilerParams(
            dimension_semantics=("parallel",)),
    )(x_t, phi_p, m_t)

    return out_t[:, :b].T


def _reference_forward(x, patterns, temperature, lr, max_iter, tol, mask):
    """Pure-JAX reference (uses jax.grad, mirrors the torch loop exactly)."""
    def phi(z):
        f1 = z[:, 0] ** 2 + z[:, 1] ** 2
        f2 = z[:, 0] ** 2 * z[:, 1] ** 2
        f3 = z[:, 0] ** 3 * z[:, 1] - z[:, 0] * z[:, 1] ** 3
        return jnp.stack((f1, f2, f3), axis=1)

    phi_p = phi(patterns)

    def energy_sum(xx):
        phi_x = phi(xx)
        logits = phi_x @ phi_p.T
        lse = (1.0 / temperature) * jnp.log(
            jnp.sum(jnp.exp(temperature * logits), axis=1))
        l2 = 0.5 * jnp.sum(phi_x ** 2, axis=1)
        return jnp.sum(-lse + l2)

    grad_fn = jax.grad(energy_sum)

    def body(_, carry):
        xc, done = carry
        g = grad_fn(xc)
        x_new = jnp.where(mask, xc - lr * g, xc)
        converged = jnp.all(jnp.abs(x_new - xc) < tol)
        new_done = jnp.logical_or(done, converged)
        x_out = jnp.where(new_done, xc, x_new)
        return x_out, new_done

    xf, _ = lax.fori_loop(0, max_iter, body, (x, jnp.array(False)))
    return xf


if __name__ == "__main__":
    key = jax.random.PRNGKey(0)
    kp, kx = jax.random.split(key)

    num_patterns, batch = 4, 8
    patterns = jax.random.normal(kp, (num_patterns, 2), dtype=jnp.float32)
    x = 0.8 * jax.random.normal(kx, (batch, 2), dtype=jnp.float32)

    temperature, lr, max_iter, tol = 1.0, 0.01, 1000, 1e-6

    out = rotation_hopfield_forward(x, patterns, temperature=temperature,
                                    lr=lr, max_iter=max_iter, tol=tol)
    out = jax.block_until_ready(out)

    ref = jax.jit(functools.partial(
        _reference_forward, temperature=temperature, lr=lr,
        max_iter=max_iter, tol=tol, mask=jnp.ones_like(x, dtype=bool)))(x, patterns)
    ref = jax.block_until_ready(ref)

    np.testing.assert_allclose(np.asarray(out), np.asarray(ref),
                               rtol=1e-3, atol=1e-3)
    print("KERNEL_OK")
</pallas_src>

<mosaic_0001>
module attributes {stable_mosaic.version = 11 : i64} {
  func.func @_rotation_hn_kernel(%arg0: i32, %arg1: memref<2x128xf32, #tpu.memory_space<vmem>>, %arg2: memref<4x3xf32, #tpu.memory_space<vmem>>, %arg3: memref<2x128xf32, #tpu.memory_space<vmem>>, %arg4: memref<2x128xf32, #tpu.memory_space<vmem>>) attributes {dimension_semantics = [#tpu.dimension_semantics<parallel>], iteration_bounds = array<i64: 1>, scalar_prefetch = 0 : i64, scratch_operands = 0 : i64, tpu.core_type = #tpu.core_type<tc>, window_params = [{transform_indices = @transform_0, window_bounds = array<i64: 2, 128>}, {pipeline_mode = #tpu.pipeline_mode<synchronous>, transform_indices = @transform_1, window_bounds = array<i64: 4, 3>}, {transform_indices = @transform_2, window_bounds = array<i64: 2, 128>}, {transform_indices = @transform_3, window_bounds = array<i64: 2, 128>}]} {
    %c0 = arith.constant 0 : index
    %c0_0 = arith.constant 0 : index
    %0 = vector.load %arg1[%c0, %c0_0] : memref<2x128xf32, #tpu.memory_space<vmem>>, vector<1x128xf32>
    %c1 = arith.constant 1 : index
    %c0_1 = arith.constant 0 : index
    %1 = vector.load %arg1[%c1, %c0_1] : memref<2x128xf32, #tpu.memory_space<vmem>>, vector<1x128xf32>
    %c0_2 = arith.constant 0 : index
    %c0_3 = arith.constant 0 : index
    %2 = vector.load %arg3[%c0_2, %c0_3] : memref<2x128xf32, #tpu.memory_space<vmem>>, vector<1x128xf32>
    %cst = arith.constant 0.00999999977 : f32
    %3 = vector.broadcast %cst : f32 to vector<1x128xf32>
    %4 = arith.mulf %3, %2 : vector<1x128xf32>
    %c1_4 = arith.constant 1 : index
    %c0_5 = arith.constant 0 : index
    %5 = vector.load %arg3[%c1_4, %c0_5] : memref<2x128xf32, #tpu.memory_space<vmem>>, vector<1x128xf32>
    %cst_6 = arith.constant 0.00999999977 : f32
    %6 = vector.broadcast %cst_6 : f32 to vector<1x128xf32>
    %7 = arith.mulf %6, %5 : vector<1x128xf32>
    %c0_7 = arith.constant 0 : index
    %c0_8 = arith.constant 0 : index
    %8 = vector.load %arg2[%c0_7, %c0_8] : memref<4x3xf32, #tpu.memory_space<vmem>>, vector<4x1xf32>
    %c0_9 = arith.constant 0 : index
    %c1_10 = arith.constant 1 : index
    %9 = vector.load %arg2[%c0_9, %c1_10] : memref<4x3xf32, #tpu.memory_space<vmem>>, vector<4x1xf32>
    %c0_11 = arith.constant 0 : index
    %c2 = arith.constant 2 : index
    %10 = vector.load %arg2[%c0_11, %c2] : memref<4x3xf32, #tpu.memory_space<vmem>>, vector<4x1xf32>
    %cst_12 = arith.constant 0.000000e+00 : f32
    %c0_i32 = arith.constant 0 : i32
    %c125_i32 = arith.constant 125 : i32
    %11 = arith.addi %c0_i32, %c125_i32 : i32
    %c1_i32 = arith.constant 1 : i32
    %12:3 = scf.for %arg5 = %c0_i32 to %11 step %c1_i32 iter_args(%arg6 = %0, %arg7 = %1, %arg8 = %cst_12) -> (vector<1x128xf32>, vector<1x128xf32>, f32)  : i32 {
      %cst_17 = arith.constant 1.000000e+00 : f32
      %15 = arith.subf %cst_17, %arg8 : f32
      %16 = vector.broadcast %15 : f32 to vector<1x128xf32>
      %17 = arith.mulf %4, %16 : vector<1x128xf32>
      %18 = vector.broadcast %15 : f32 to vector<1x128xf32>
      %19 = arith.mulf %7, %18 : vector<1x128xf32>
      %20 = arith.mulf %arg6, %arg6 : vector<1x128xf32>
      %21 = arith.mulf %arg7, %arg7 : vector<1x128xf32>
      %22 = arith.mulf %arg6, %arg7 : vector<1x128xf32>
      %23 = arith.addf %20, %21 : vector<1x128xf32>
      %24 = arith.mulf %20, %21 : vector<1x128xf32>
      %25 = arith.subf %20, %21 : vector<1x128xf32>
      %26 = arith.mulf %22, %25 : vector<1x128xf32>
      %27 = vector.broadcast %23 : vector<1x128xf32> to vector<4x128xf32>
      %28 = vector.broadcast %8 : vector<4x1xf32> to vector<4x128xf32>
      %29 = arith.mulf %27, %28 : vector<4x128xf32>
      %30 = vector.broadcast %24 : vector<1x128xf32> to vector<4x128xf32>
      %31 = vector.broadcast %9 : vector<4x1xf32> to vector<4x128xf32>
      %32 = arith.mulf %30, %31 : vector<4x128xf32>
      %33 = arith.addf %29, %32 : vector<4x128xf32>
      %34 = vector.broadcast %26 : vector<1x128xf32> to vector<4x128xf32>
      %35 = vector.broadcast %10 : vector<4x1xf32> to vector<4x128xf32>
      %36 = arith.mulf %34, %35 : vector<4x128xf32>
      %37 = arith.addf %33, %36 : vector<4x128xf32>
      %cst_18 = arith.constant 1.000000e+00 : f32
      %38 = vector.broadcast %cst_18 : f32 to vector<4x128xf32>
      %39 = arith.mulf %38, %37 : vector<4x128xf32>
      %cst_19 = arith.constant dense<0xFF800000> : vector<128xf32>
      %40 = vector.multi_reduction <maximumf>, %39, %cst_19 [0] : vector<4x128xf32> to vector<128xf32>
      %41 = vector.shape_cast %40 : vector<128xf32> to vector<1x128xf32>
      %42 = vector.broadcast %41 : vector<1x128xf32> to vector<4x128xf32>
      %43 = arith.subf %39, %42 : vector<4x128xf32>
      %44 = math.exp %43 : vector<4x128xf32>
      %cst_20 = arith.constant dense<0.000000e+00> : vector<128xf32>
      %45 = vector.multi_reduction <add>, %44, %cst_20 [0] : vector<4x128xf32> to vector<128xf32>
      %46 = vector.shape_cast %45 : vector<128xf32> to vector<1x128xf32>
      %cst_21 = arith.constant 1.000000e+00 : f32
      %47 = vector.broadcast %cst_21 : f32 to vector<1x128xf32>
      %48 = arith.divf %47, %46 : vector<1x128xf32>
      %49 = vector.broadcast %8 : vector<4x1xf32> to vector<4x128xf32>
      %50 = arith.mulf %44, %49 : vector<4x128xf32>
      %cst_22 = arith.constant dense<0.000000e+00> : vector<128xf32>
      %51 = vector.multi_reduction <add>, %50, %cst_22 [0] : vector<4x128xf32> to vector<128xf32>
      %52 = vector.shape_cast %51 : vector<128xf32> to vector<1x128xf32>
      %53 = arith.mulf %48, %52 : vector<1x128xf32>
      %54 = arith.subf %23, %53 : vector<1x128xf32>
      %55 = vector.broadcast %9 : vector<4x1xf32> to vector<4x128xf32>
      %56 = arith.mulf %44, %55 : vector<4x128xf32>
      %cst_23 = arith.constant dense<0.000000e+00> : vector<128xf32>
      %57 = vector.multi_reduction <add>, %56, %cst_23 [0] : vector<4x128xf32> to vector<128xf32>
      %58 = vector.shape_cast %57 : vector<128xf32> to vector<1x128xf32>
      %59 = arith.mulf %48, %58 : vector<1x128xf32>
      %60 = arith.subf %24, %59 : vector<1x128xf32>
      %61 = vector.broadcast %10 : vector<4x1xf32> to vector<4x128xf32>
      %62 = arith.mulf %44, %61 : vector<4x128xf32>
      %cst_24 = arith.constant dense<0.000000e+00> : vector<128xf32>
      %63 = vector.multi_reduction <add>, %62, %cst_24 [0] : vector<4x128xf32> to vector<128xf32>
      %64 = vector.shape_cast %63 : vector<128xf32> to vector<1x128xf32>
      %65 = arith.mulf %48, %64 : vector<1x128xf32>
      %66 = arith.subf %26, %65 : vector<1x128xf32>
      %cst_25 = arith.constant 2.000000e+00 : f32
      %67 = vector.broadcast %cst_25 : f32 to vector<1x128xf32>
      %68 = arith.mulf %67, %arg6 : vector<1x128xf32>
      %69 = arith.mulf %54, %68 : vector<1x128xf32>
      %cst_26 = arith.constant 2.000000e+00 : f32
      %70 = vector.broadcast %cst_26 : f32 to vector<1x128xf32>
      %71 = arith.mulf %70, %arg6 : vector<1x128xf32>
      %72 = arith.mulf %71, %21 : vector<1x128xf32>
      %73 = arith.mulf %60, %72 : vector<1x128xf32>
      %74 = arith.addf %69, %73 : vector<1x128xf32>
      %cst_27 = arith.constant 3.000000e+00 : f32
      %75 = vector.broadcast %cst_27 : f32 to vector<1x128xf32>
      %76 = arith.mulf %75, %20 : vector<1x128xf32>
      %77 = arith.mulf %76, %arg7 : vector<1x128xf32>
      %78 = arith.mulf %21, %arg7 : vector<1x128xf32>
      %79 = arith.subf %77, %78 : vector<1x128xf32>
      %80 = arith.mulf %66, %79 : vector<1x128xf32>
      %81 = arith.addf %74, %80 : vector<1x128xf32>
      %cst_28 = arith.constant 2.000000e+00 : f32
      %82 = vector.broadcast %cst_28 : f32 to vector<1x128xf32>
      %83 = arith.mulf %82, %arg7 : vector<1x128xf32>
      %84 = arith.mulf %54, %83 : vector<1x128xf32>
      %cst_29 = arith.constant 2.000000e+00 : f32
      %85 = vector.broadcast %cst_29 : f32 to vector<1x128xf32>
      %86 = arith.mulf %85, %20 : vector<1x128xf32>
      %87 = arith.mulf %86, %arg7 : vector<1x128xf32>
      %88 = arith.mulf %60, %87 : vector<1x128xf32>
      %89 = arith.addf %84, %88 : vector<1x128xf32>
      %90 = arith.mulf %20, %arg6 : vector<1x128xf32>
      %cst_30 = arith.constant 3.000000e+00 : f32
      %91 = vector.broadcast %cst_30 : f32 to vector<1x128xf32>
      %92 = arith.mulf %91, %arg6 : vector<1x128xf32>
      %93 = arith.mulf %92, %21 : vector<1x128xf32>
      %94 = arith.subf %90, %93 : vector<1x128xf32>
      %95 = arith.mulf %66, %94 : vector<1x128xf32>
      %96 = arith.addf %89, %95 : vector<1x128xf32>
      %97 = arith.mulf %17, %81 : vector<1x128xf32>
      %98 = arith.subf %arg6, %97 : vector<1x128xf32>
      %99 = arith.mulf %19, %96 : vector<1x128xf32>
      %100 = arith.subf %arg7, %99 : vector<1x128xf32>
      %101 = arith.mulf %98, %98 : vector<1x128xf32>
      %102 = arith.mulf %100, %100 : vector<1x128xf32>
      %103 = arith.mulf %98, %100 : vector<1x128xf32>
      %104 = arith.addf %101, %102 : vector<1x128xf32>
      %105 = arith.mulf %101, %102 : vector<1x128xf32>
      %106 = arith.subf %101, %102 : vector<1x128xf32>
      %107 = arith.mulf %103, %106 : vector<1x128xf32>
      %108 = vector.broadcast %104 : vector<1x128xf32> to vector<4x128xf32>
      %109 = vector.broadcast %8 : vector<4x1xf32> to vector<4x128xf32>
      %110 = arith.mulf %108, %109 : vector<4x128xf32>
      %111 = vector.broadcast %105 : vector<1x128xf32> to vector<4x128xf32>
      %112 = vector.broadcast %9 : vector<4x1xf32> to vector<4x128xf32>
      %113 = arith.mulf %111, %112 : vector<4x128xf32>
      %114 = arith.addf %110, %113 : vector<4x128xf32>
      %115 = vector.broadcast %107 : vector<1x128xf32> to vector<4x128xf32>
      %116 = vector.broadcast %10 : vector<4x1xf32> to vector<4x128xf32>
      %117 = arith.mulf %115, %116 : vector<4x128xf32>
      %118 = arith.addf %114, %117 : vector<4x128xf32>
      %cst_31 = arith.constant 1.000000e+00 : f32
      %119 = vector.broadcast %cst_31 : f32 to vector<4x128xf32>
      %120 = arith.mulf %119, %118 : vector<4x128xf32>
      %cst_32 = arith.constant dense<0xFF800000> : vector<128xf32>
      %121 = vector.multi_reduction <maximumf>, %120, %cst_32 [0] : vector<4x128xf32> to vector<128xf32>
      %122 = vector.shape_cast %121 : vector<128xf32> to vector<1x128xf32>
      %123 = vector.broadcast %122 : vector<1x128xf32> to vector<4x128xf32>
      %124 = arith.subf %120, %123 : vector<4x128xf32>
      %125 = math.exp %124 : vector<4x128xf32>
      %cst_33 = arith.constant dense<0.000000e+00> : vector<128xf32>
      %126 = vector.multi_reduction <add>, %125, %cst_33 [0] : vector<4x128xf32> to vector<128xf32>
      %127 = vector.shape_cast %126 : vector<128xf32> to vector<1x128xf32>
      %cst_34 = arith.constant 1.000000e+00 : f32
      %128 = vector.broadcast %cst_34 : f32 to vector<1x128xf32>
      %129 = arith.divf %128, %127 : vector<1x128xf32>
      %130 = vector.broadcast %8 : vector<4x1xf32> to vector<4x128xf32>
      %131 = arith.mulf %125, %130 : vector<4x128xf32>
      %cst_35 = arith.constant dense<0.000000e+00> : vector<128xf32>
      %132 = vector.multi_reduction <add>, %131, %cst_35 [0] : vector<4x128xf32> to vector<128xf32>
      %133 = vector.shape_cast %132 : vector<128xf32> to vector<1x128xf32>
      %134 = arith.mulf %129, %133 : vector<1x128xf32>
      %135 = arith.subf %104, %134 : vector<1x128xf32>
      %136 = vector.broadcast %9 : vector<4x1xf32> to vector<4x128xf32>
      %137 = arith.mulf %125, %136 : vector<4x128xf32>
      %cst_36 = arith.constant dense<0.000000e+00> : vector<128xf32>
      %138 = vector.multi_reduction <add>, %137, %cst_36 [0] : vector<4x128xf32> to vector<128xf32>
      %139 = vector.shape_cast %138 : vector<128xf32> to vector<1x128xf32>
      %140 = arith.mulf %129, %139 : vector<1x128xf32>
      %141 = arith.subf %105, %140 : vector<1x128xf32>
      %142 = vector.broadcast %10 : vector<4x1xf32> to vector<4x128xf32>
      %143 = arith.mulf %125, %142 : vector<4x128xf32>
      %cst_37 = arith.constant dense<0.000000e+00> : vector<128xf32>
      %144 = vector.multi_reduction <add>, %143, %cst_37 [0] : vector<4x128xf32> to vector<128xf32>
      %145 = vector.shape_cast %144 : vector<128xf32> to vector<1x128xf32>
      %146 = arith.mulf %129, %145 : vector<1x128xf32>
      %147 = arith.subf %107, %146 : vector<1x128xf32>
      %cst_38 = arith.constant 2.000000e+00 : f32
      %148 = vector.broadcast %cst_38 : f32 to vector<1x128xf32>
      %149 = arith.mulf %148, %98 : vector<1x128xf32>
      %150 = arith.mulf %135, %149 : vector<1x128xf32>
      %cst_39 = arith.constant 2.000000e+00 : f32
      %151 = vector.broadcast %cst_39 : f32 to vector<1x128xf32>
      %152 = arith.mulf %151, %98 : vector<1x128xf32>
      %153 = arith.mulf %152, %102 : vector<1x128xf32>
      %154 = arith.mulf %141, %153 : vector<1x128xf32>
      %155 = arith.addf %150, %154 : vector<1x128xf32>
      %cst_40 = arith.constant 3.000000e+00 : f32
      %156 = vector.broadcast %cst_40 : f32 to vector<1x128xf32>
      %157 = arith.mulf %156, %101 : vector<1x128xf32>
      %158 = arith.mulf %157, %100 : vector<1x128xf32>
      %159 = arith.mulf %102, %100 : vector<1x128xf32>
      %160 = arith.subf %158, %159 : vector<1x128xf32>
      %161 = arith.mulf %147, %160 : vector<1x128xf32>
      %162 = arith.addf %155, %161 : vector<1x128xf32>
      %cst_41 = arith.constant 2.000000e+00 : f32
      %163 = vector.broadcast %cst_41 : f32 to vector<1x128xf32>
      %164 = arith.mulf %163, %100 : vector<1x128xf32>
      %165 = arith.mulf %135, %164 : vector<1x128xf32>
      %cst_42 = arith.constant 2.000000e+00 : f32
      %166 = vector.broadcast %cst_42 : f32 to vector<1x128xf32>
      %167 = arith.mulf %166, %101 : vector<1x128xf32>
      %168 = arith.mulf %167, %100 : vector<1x128xf32>
      %169 = arith.mulf %141, %168 : vector<1x128xf32>
      %170 = arith.addf %165, %169 : vector<1x128xf32>
      %171 = arith.mulf %101, %98 : vector<1x128xf32>
      %cst_43 = arith.constant 3.000000e+00 : f32
      %172 = vector.broadcast %cst_43 : f32 to vector<1x128xf32>
      %173 = arith.mulf %172, %98 : vector<1x128xf32>
      %174 = arith.mulf %173, %102 : vector<1x128xf32>
      %175 = arith.subf %171, %174 : vector<1x128xf32>
      %176 = arith.mulf %147, %175 : vector<1x128xf32>
      %177 = arith.addf %170, %176 : vector<1x128xf32>
      %178 = arith.mulf %17, %162 : vector<1x128xf32>
      %179 = arith.subf %98, %178 : vector<1x128xf32>
      %180 = arith.mulf %19, %177 : vector<1x128xf32>
      %181 = arith.subf %100, %180 : vector<1x128xf32>
      %182 = arith.mulf %179, %179 : vector<1x128xf32>
      %183 = arith.mulf %181, %181 : vector<1x128xf32>
      %184 = arith.mulf %179, %181 : vector<1x128xf32>
      %185 = arith.addf %182, %183 : vector<1x128xf32>
      %186 = arith.mulf %182, %183 : vector<1x128xf32>
      %187 = arith.subf %182, %183 : vector<1x128xf32>
      %188 = arith.mulf %184, %187 : vector<1x128xf32>
      %189 = vector.broadcast %185 : vector<1x128xf32> to vector<4x128xf32>
      %190 = vector.broadcast %8 : vector<4x1xf32> to vector<4x128xf32>
      %191 = arith.mulf %189, %190 : vector<4x128xf32>
      %192 = vector.broadcast %186 : vector<1x128xf32> to vector<4x128xf32>
      %193 = vector.broadcast %9 : vector<4x1xf32> to vector<4x128xf32>
      %194 = arith.mulf %192, %193 : vector<4x128xf32>
      %195 = arith.addf %191, %194 : vector<4x128xf32>
      %196 = vector.broadcast %188 : vector<1x128xf32> to vector<4x128xf32>
      %197 = vector.broadcast %10 : vector<4x1xf32> to vector<4x128xf32>
      %198 = arith.mulf %196, %197 : vector<4x128xf32>
      %199 = arith.addf %195, %198 : vector<4x128xf32>
      %cst_44 = arith.constant 1.000000e+00 : f32
      %200 = vector.broadcast %cst_44 : f32 to vector<4x128xf32>
      %201 = arith.mulf %200, %199 : vector<4x128xf32>
      %cst_45 = arith.constant dense<0xFF800000> : vector<128xf32>
      %202 = vector.multi_reduction <maximumf>, %201, %cst_45 [0] : vector<4x128xf32> to vector<128xf32>
      %203 = vector.shape_cast %202 : vector<128xf32> to vector<1x128xf32>
      %204 = vector.broadcast %203 : vector<1x128xf32> to vector<4x128xf32>
      %205 = arith.subf %201, %204 : vector<4x128xf32>
      %206 = math.exp %205 : vector<4x128xf32>
      %cst_46 = arith.constant dense<0.000000e+00> : vector<128xf32>
      %207 = vector.multi_reduction <add>, %206, %cst_46 [0] : vector<4x128xf32> to vector<128xf32>
      %208 = vector.shape_cast %207 : vector<128xf32> to vector<1x128xf32>
      %cst_47 = arith.constant 1.000000e+00 : f32
      %209 = vector.broadcast %cst_47 : f32 to vector<1x128xf32>
      %210 = arith.divf %209, %208 : vector<1x128xf32>
      %211 = vector.broadcast %8 : vector<4x1xf32> to vector<4x128xf32>
      %212 = arith.mulf %206, %211 : vector<4x128xf32>
      %cst_48 = arith.constant dense<0.000000e+00> : vector<128xf32>
      %213 = vector.multi_reduction <add>, %212, %cst_48 [0] : vector<4x128xf32> to vector<128xf32>
      %214 = vector.shape_cast %213 : vector<128xf32> to vector<1x128xf32>
      %215 = arith.mulf %210, %214 : vector<1x128xf32>
      %216 = arith.subf %185, %215 : vector<1x128xf32>
      %217 = vector.broadcast %9 : vector<4x1xf32> to vector<4x128xf32>
      %218 = arith.mulf %206, %217 : vector<4x128xf32>
      %cst_49 = arith.constant dense<0.000000e+00> : vector<128xf32>
      %219 = vector.multi_reduction <add>, %218, %cst_49 [0] : vector<4x128xf32> to vector<128xf32>
      %220 = vector.shape_cast %219 : vector<128xf32> to vector<1x128xf32>
      %221 = arith.mulf %210, %220 : vector<1x128xf32>
      %222 = arith.subf %186, %221 : vector<1x128xf32>
      %223 = vector.broadcast %10 : vector<4x1xf32> to vector<4x128xf32>
      %224 = arith.mulf %206, %223 : vector<4x128xf32>
      %cst_50 = arith.constant dense<0.000000e+00> : vector<128xf32>
      %225 = vector.multi_reduction <add>, %224, %cst_50 [0] : vector<4x128xf32> to vector<128xf32>
      %226 = vector.shape_cast %225 : vector<128xf32> to vector<1x128xf32>
      %227 = arith.mulf %210, %226 : vector<1x128xf32>
      %228 = arith.subf %188, %227 : vector<1x128xf32>
      %cst_51 = arith.constant 2.000000e+00 : f32
      %229 = vector.broadcast %cst_51 : f32 to vector<1x128xf32>
      %230 = arith.mulf %229, %179 : vector<1x128xf32>
      %231 = arith.mulf %216, %230 : vector<1x128xf32>
      %cst_52 = arith.constant 2.000000e+00 : f32
      %232 = vector.broadcast %cst_52 : f32 to vector<1x128xf32>
      %233 = arith.mulf %232, %179 : vector<1x128xf32>
      %234 = arith.mulf %233, %183 : vector<1x128xf32>
      %235 = arith.mulf %222, %234 : vector<1x128xf32>
      %236 = arith.addf %231, %235 : vector<1x128xf32>
      %cst_53 = arith.constant 3.000000e+00 : f32
      %237 = vector.broadcast %cst_53 : f32 to vector<1x128xf32>
      %238 = arith.mulf %237, %182 : vector<1x128xf32>
      %239 = arith.mulf %238, %181 : vector<1x128xf32>
      %240 = arith.mulf %183, %181 : vector<1x128xf32>
      %241 = arith.subf %239, %240 : vector<1x128xf32>
      %242 = arith.mulf %228, %241 : vector<1x128xf32>
      %243 = arith.addf %236, %242 : vector<1x128xf32>
      %cst_54 = arith.constant 2.000000e+00 : f32
      %244 = vector.broadcast %cst_54 : f32 to vector<1x128xf32>
      %245 = arith.mulf %244, %181 : vector<1x128xf32>
      %246 = arith.mulf %216, %245 : vector<1x128xf32>
      %cst_55 = arith.constant 2.000000e+00 : f32
      %247 = vector.broadcast %cst_55 : f32 to vector<1x128xf32>
      %248 = arith.mulf %247, %182 : vector<1x128xf32>
      %249 = arith.mulf %248, %181 : vector<1x128xf32>
      %250 = arith.mulf %222, %249 : vector<1x128xf32>
      %251 = arith.addf %246, %250 : vector<1x128xf32>
      %252 = arith.mulf %182, %179 : vector<1x128xf32>
      %cst_56 = arith.constant 3.000000e+00 : f32
      %253 = vector.broadcast %cst_56 : f32 to vector<1x128xf32>
      %254 = arith.mulf %253, %179 : vector<1x128xf32>
      %255 = arith.mulf %254, %183 : vector<1x128xf32>
      %256 = arith.subf %252, %255 : vector<1x128xf32>
      %257 = arith.mulf %228, %256 : vector<1x128xf32>
      %258 = arith.addf %251, %257 : vector<1x128xf32>
      %259 = arith.mulf %17, %243 : vector<1x128xf32>
      %260 = arith.subf %179, %259 : vector<1x128xf32>
      %261 = arith.mulf %19, %258 : vector<1x128xf32>
      %262 = arith.subf %181, %261 : vector<1x128xf32>
      %263 = arith.mulf %260, %260 : vector<1x128xf32>
      %264 = arith.mulf %262, %262 : vector<1x128xf32>
      %265 = arith.mulf %260, %262 : vector<1x128xf32>
      %266 = arith.addf %263, %264 : vector<1x128xf32>
      %267 = arith.mulf %263, %264 : vector<1x128xf32>
      %268 = arith.subf %263, %264 : vector<1x128xf32>
      %269 = arith.mulf %265, %268 : vector<1x128xf32>
      %270 = vector.broadcast %266 : vector<1x128xf32> to vector<4x128xf32>
      %271 = vector.broadcast %8 : vector<4x1xf32> to vector<4x128xf32>
      %272 = arith.mulf %270, %271 : vector<4x128xf32>
      %273 = vector.broadcast %267 : vector<1x128xf32> to vector<4x128xf32>
      %274 = vector.broadcast %9 : vector<4x1xf32> to vector<4x128xf32>
      %275 = arith.mulf %273, %274 : vector<4x128xf32>
      %276 = arith.addf %272, %275 : vector<4x128xf32>
      %277 = vector.broadcast %269 : vector<1x128xf32> to vector<4x128xf32>
      %278 = vector.broadcast %10 : vector<4x1xf32> to vector<4x128xf32>
      %279 = arith.mulf %277, %278 : vector<4x128xf32>
      %280 = arith.addf %276, %279 : vector<4x128xf32>
      %cst_57 = arith.constant 1.000000e+00 : f32
      %281 = vector.broadcast %cst_57 : f32 to vector<4x128xf32>
      %282 = arith.mulf %281, %280 : vector<4x128xf32>
      %cst_58 = arith.constant dense<0xFF800000> : vector<128xf32>
      %283 = vector.multi_reduction <maximumf>, %282, %cst_58 [0] : vector<4x128xf32> to vector<128xf32>
      %284 = vector.shape_cast %283 : vector<128xf32> to vector<1x128xf32>
      %285 = vector.broadcast %284 : vector<1x128xf32> to vector<4x128xf32>
      %286 = arith.subf %282, %285 : vector<4x128xf32>
      %287 = math.exp %286 : vector<4x128xf32>
      %cst_59 = arith.constant dense<0.000000e+00> : vector<128xf32>
      %288 = vector.multi_reduction <add>, %287, %cst_59 [0] : vector<4x128xf32> to vector<128xf32>
      %289 = vector.shape_cast %288 : vector<128xf32> to vector<1x128xf32>
      %cst_60 = arith.constant 1.000000e+00 : f32
      %290 = vector.broadcast %cst_60 : f32 to vector<1x128xf32>
      %291 = arith.divf %290, %289 : vector<1x128xf32>
      %292 = vector.broadcast %8 : vector<4x1xf32> to vector<4x128xf32>
      %293 = arith.mulf %287, %292 : vector<4x128xf32>
      %cst_61 = arith.constant dense<0.000000e+00> : vector<128xf32>
      %294 = vector.multi_reduction <add>, %293, %cst_61 [0] : vector<4x128xf32> to vector<128xf32>
      %295 = vector.shape_cast %294 : vector<128xf32> to vector<1x128xf32>
      %296 = arith.mulf %291, %295 : vector<1x128xf32>
      %297 = arith.subf %266, %296 : vector<1x128xf32>
      %298 = vector.broadcast %9 : vector<4x1xf32> to vector<4x128xf32>
      %299 = arith.mulf %287, %298 : vector<4x128xf32>
      %cst_62 = arith.constant dense<0.000000e+00> : vector<128xf32>
      %300 = vector.multi_reduction <add>, %299, %cst_62 [0] : vector<4x128xf32> to vector<128xf32>
      %301 = vector.shape_cast %300 : vector<128xf32> to vector<1x128xf32>
      %302 = arith.mulf %291, %301 : vector<1x128xf32>
      %303 = arith.subf %267, %302 : vector<1x128xf32>
      %304 = vector.broadcast %10 : vector<4x1xf32> to vector<4x128xf32>
      %305 = arith.mulf %287, %304 : vector<4x128xf32>
      %cst_63 = arith.constant dense<0.000000e+00> : vector<128xf32>
      %306 = vector.multi_reduction <add>, %305, %cst_63 [0] : vector<4x128xf32> to vector<128xf32>
      %307 = vector.shape_cast %306 : vector<128xf32> to vector<1x128xf32>
      %308 = arith.mulf %291, %307 : vector<1x128xf32>
      %309 = arith.subf %269, %308 : vector<1x128xf32>
      %cst_64 = arith.constant 2.000000e+00 : f32
      %310 = vector.broadcast %cst_64 : f32 to vector<1x128xf32>
      %311 = arith.mulf %310, %260 : vector<1x128xf32>
      %312 = arith.mulf %297, %311 : vector<1x128xf32>
      %cst_65 = arith.constant 2.000000e+00 : f32
      %313 = vector.broadcast %cst_65 : f32 to vector<1x128xf32>
      %314 = arith.mulf %313, %260 : vector<1x128xf32>
      %315 = arith.mulf %314, %264 : vector<1x128xf32>
      %316 = arith.mulf %303, %315 : vector<1x128xf32>
      %317 = arith.addf %312, %316 : vector<1x128xf32>
      %cst_66 = arith.constant 3.000000e+00 : f32
      %318 = vector.broadcast %cst_66 : f32 to vector<1x128xf32>
      %319 = arith.mulf %318, %263 : vector<1x128xf32>
      %320 = arith.mulf %319, %262 : vector<1x128xf32>
      %321 = arith.mulf %264, %262 : vector<1x128xf32>
      %322 = arith.subf %320, %321 : vector<1x128xf32>
      %323 = arith.mulf %309, %322 : vector<1x128xf32>
      %324 = arith.addf %317, %323 : vector<1x128xf32>
      %cst_67 = arith.constant 2.000000e+00 : f32
      %325 = vector.broadcast %cst_67 : f32 to vector<1x128xf32>
      %326 = arith.mulf %325, %262 : vector<1x128xf32>
      %327 = arith.mulf %297, %326 : vector<1x128xf32>
      %cst_68 = arith.constant 2.000000e+00 : f32
      %328 = vector.broadcast %cst_68 : f32 to vector<1x128xf32>
      %329 = arith.mulf %328, %263 : vector<1x128xf32>
      %330 = arith.mulf %329, %262 : vector<1x128xf32>
      %331 = arith.mulf %303, %330 : vector<1x128xf32>
      %332 = arith.addf %327, %331 : vector<1x128xf32>
      %333 = arith.mulf %263, %260 : vector<1x128xf32>
      %cst_69 = arith.constant 3.000000e+00 : f32
      %334 = vector.broadcast %cst_69 : f32 to vector<1x128xf32>
      %335 = arith.mulf %334, %260 : vector<1x128xf32>
      %336 = arith.mulf %335, %264 : vector<1x128xf32>
      %337 = arith.subf %333, %336 : vector<1x128xf32>
      %338 = arith.mulf %309, %337 : vector<1x128xf32>
      %339 = arith.addf %332, %338 : vector<1x128xf32>
      %340 = arith.mulf %17, %324 : vector<1x128xf32>
      %341 = arith.subf %260, %340 : vector<1x128xf32>
      %342 = arith.mulf %19, %339 : vector<1x128xf32>
      %343 = arith.subf %262, %342 : vector<1x128xf32>
      %344 = arith.mulf %341, %341 : vector<1x128xf32>
      %345 = arith.mulf %343, %343 : vector<1x128xf32>
      %346 = arith.mulf %341, %343 : vector<1x128xf32>
      %347 = arith.addf %344, %345 : vector<1x128xf32>
      %348 = arith.mulf %344, %345 : vector<1x128xf32>
      %349 = arith.subf %344, %345 : vector<1x128xf32>
      %350 = arith.mulf %346, %349 : vector<1x128xf32>
      %351 = vector.broadcast %347 : vector<1x128xf32> to vector<4x128xf32>
      %352 = vector.broadcast %8 : vector<4x1xf32> to vector<4x128xf32>
      %353 = arith.mulf %351, %352 : vector<4x128xf32>
      %354 = vector.broadcast %348 : vector<1x128xf32> to vector<4x128xf32>
      %355 = vector.broadcast %9 : vector<4x1xf32> to vector<4x128xf32>
      %356 = arith.mulf %354, %355 : vector<4x128xf32>
      %357 = arith.addf %353, %356 : vector<4x128xf32>
      %358 = vector.broadcast %350 : vector<1x128xf32> to vector<4x128xf32>
      %359 = vector.broadcast %10 : vector<4x1xf32> to vector<4x128xf32>
      %360 = arith.mulf %358, %359 : vector<4x128xf32>
      %361 = arith.addf %357, %360 : vector<4x128xf32>
      %cst_70 = arith.constant 1.000000e+00 : f32
      %362 = vector.broadcast %cst_70 : f32 to vector<4x128xf32>
      %363 = arith.mulf %362, %361 : vector<4x128xf32>
      %cst_71 = arith.constant dense<0xFF800000> : vector<128xf32>
      %364 = vector.multi_reduction <maximumf>, %363, %cst_71 [0] : vector<4x128xf32> to vector<128xf32>
      %365 = vector.shape_cast %364 : vector<128xf32> to vector<1x128xf32>
      %366 = vector.broadcast %365 : vector<1x128xf32> to vector<4x128xf32>
      %367 = arith.subf %363, %366 : vector<4x128xf32>
      %368 = math.exp %367 : vector<4x128xf32>
      %cst_72 = arith.constant dense<0.000000e+00> : vector<128xf32>
      %369 = vector.multi_reduction <add>, %368, %cst_72 [0] : vector<4x128xf32> to vector<128xf32>
      %370 = vector.shape_cast %369 : vector<128xf32> to vector<1x128xf32>
      %cst_73 = arith.constant 1.000000e+00 : f32
      %371 = vector.broadcast %cst_73 : f32 to vector<1x128xf32>
      %372 = arith.divf %371, %370 : vector<1x128xf32>
      %373 = vector.broadcast %8 : vector<4x1xf32> to vector<4x128xf32>
      %374 = arith.mulf %368, %373 : vector<4x128xf32>
      %cst_74 = arith.constant dense<0.000000e+00> : vector<128xf32>
      %375 = vector.multi_reduction <add>, %374, %cst_74 [0] : vector<4x128xf32> to vector<128xf32>
      %376 = vector.shape_cast %375 : vector<128xf32> to vector<1x128xf32>
      %377 = arith.mulf %372, %376 : vector<1x128xf32>
      %378 = arith.subf %347, %377 : vector<1x128xf32>
      %379 = vector.broadcast %9 : vector<4x1xf32> to vector<4x128xf32>
      %380 = arith.mulf %368, %379 : vector<4x128xf32>
      %cst_75 = arith.constant dense<0.000000e+00> : vector<128xf32>
      %381 = vector.multi_reduction <add>, %380, %cst_75 [0] : vector<4x128xf32> to vector<128xf32>
      %382 = vector.shape_cast %381 : vector<128xf32> to vector<1x128xf32>
      %383 = arith.mulf %372, %382 : vector<1x128xf32>
      %384 = arith.subf %348, %383 : vector<1x128xf32>
      %385 = vector.broadcast %10 : vector<4x1xf32> to vector<4x128xf32>
      %386 = arith.mulf %368, %385 : vector<4x128xf32>
      %cst_76 = arith.constant dense<0.000000e+00> : vector<128xf32>
      %387 = vector.multi_reduction <add>, %386, %cst_76 [0] : vector<4x128xf32> to vector<128xf32>
      %388 = vector.shape_cast %387 : vector<128xf32> to vector<1x128xf32>
      %389 = arith.mulf %372, %388 : vector<1x128xf32>
      %390 = arith.subf %350, %389 : vector<1x128xf32>
      %cst_77 = arith.constant 2.000000e+00 : f32
      %391 = vector.broadcast %cst_77 : f32 to vector<1x128xf32>
      %392 = arith.mulf %391, %341 : vector<1x128xf32>
      %393 = arith.mulf %378, %392 : vector<1x128xf32>
      %cst_78 = arith.constant 2.000000e+00 : f32
      %394 = vector.broadcast %cst_78 : f32 to vector<1x128xf32>
      %395 = arith.mulf %394, %341 : vector<1x128xf32>
      %396 = arith.mulf %395, %345 : vector<1x128xf32>
      %397 = arith.mulf %384, %396 : vector<1x128xf32>
      %398 = arith.addf %393, %397 : vector<1x128xf32>
      %cst_79 = arith.constant 3.000000e+00 : f32
      %399 = vector.broadcast %cst_79 : f32 to vector<1x128xf32>
      %400 = arith.mulf %399, %344 : vector<1x128xf32>
      %401 = arith.mulf %400, %343 : vector<1x128xf32>
      %402 = arith.mulf %345, %343 : vector<1x128xf32>
      %403 = arith.subf %401, %402 : vector<1x128xf32>
      %404 = arith.mulf %390, %403 : vector<1x128xf32>
      %405 = arith.addf %398, %404 : vector<1x128xf32>
      %cst_80 = arith.constant 2.000000e+00 : f32
      %406 = vector.broadcast %cst_80 : f32 to vector<1x128xf32>
      %407 = arith.mulf %406, %343 : vector<1x128xf32>
      %408 = arith.mulf %378, %407 : vector<1x128xf32>
      %cst_81 = arith.constant 2.000000e+00 : f32
      %409 = vector.broadcast %cst_81 : f32 to vector<1x128xf32>
      %410 = arith.mulf %409, %344 : vector<1x128xf32>
      %411 = arith.mulf %410, %343 : vector<1x128xf32>
      %412 = arith.mulf %384, %411 : vector<1x128xf32>
      %413 = arith.addf %408, %412 : vector<1x128xf32>
      %414 = arith.mulf %344, %341 : vector<1x128xf32>
      %cst_82 = arith.constant 3.000000e+00 : f32
      %415 = vector.broadcast %cst_82 : f32 to vector<1x128xf32>
      %416 = arith.mulf %415, %341 : vector<1x128xf32>
      %417 = arith.mulf %416, %345 : vector<1x128xf32>
      %418 = arith.subf %414, %417 : vector<1x128xf32>
      %419 = arith.mulf %390, %418 : vector<1x128xf32>
      %420 = arith.addf %413, %419 : vector<1x128xf32>
      %421 = arith.mulf %17, %405 : vector<1x128xf32>
      %422 = arith.subf %341, %421 : vector<1x128xf32>
      %423 = arith.mulf %19, %420 : vector<1x128xf32>
      %424 = arith.subf %343, %423 : vector<1x128xf32>
      %425 = arith.mulf %422, %422 : vector<1x128xf32>
      %426 = arith.mulf %424, %424 : vector<1x128xf32>
      %427 = arith.mulf %422, %424 : vector<1x128xf32>
      %428 = arith.addf %425, %426 : vector<1x128xf32>
      %429 = arith.mulf %425, %426 : vector<1x128xf32>
      %430 = arith.subf %425, %426 : vector<1x128xf32>
      %431 = arith.mulf %427, %430 : vector<1x128xf32>
      %432 = vector.broadcast %428 : vector<1x128xf32> to vector<4x128xf32>
      %433 = vector.broadcast %8 : vector<4x1xf32> to vector<4x128xf32>
      %434 = arith.mulf %432, %433 : vector<4x128xf32>
      %435 = vector.broadcast %429 : vector<1x128xf32> to vector<4x128xf32>
      %436 = vector.broadcast %9 : vector<4x1xf32> to vector<4x128xf32>
      %437 = arith.mulf %435, %436 : vector<4x128xf32>
      %438 = arith.addf %434, %437 : vector<4x128xf32>
      %439 = vector.broadcast %431 : vector<1x128xf32> to vector<4x128xf32>
      %440 = vector.broadcast %10 : vector<4x1xf32> to vector<4x128xf32>
      %441 = arith.mulf %439, %440 : vector<4x128xf32>
      %442 = arith.addf %438, %441 : vector<4x128xf32>
      %cst_83 = arith.constant 1.000000e+00 : f32
      %443 = vector.broadcast %cst_83 : f32 to vector<4x128xf32>
      %444 = arith.mulf %443, %442 : vector<4x128xf32>
      %cst_84 = arith.constant dense<0xFF800000> : vector<128xf32>
      %445 = vector.multi_reduction <maximumf>, %444, %cst_84 [0] : vector<4x128xf32> to vector<128xf32>
      %446 = vector.shape_cast %445 : vector<128xf32> to vector<1x128xf32>
      %447 = vector.broadcast %446 : vector<1x128xf32> to vector<4x128xf32>
      %448 = arith.subf %444, %447 : vector<4x128xf32>
      %449 = math.exp %448 : vector<4x128xf32>
      %cst_85 = arith.constant dense<0.000000e+00> : vector<128xf32>
      %450 = vector.multi_reduction <add>, %449, %cst_85 [0] : vector<4x128xf32> to vector<128xf32>
      %451 = vector.shape_cast %450 : vector<128xf32> to vector<1x128xf32>
      %cst_86 = arith.constant 1.000000e+00 : f32
      %452 = vector.broadcast %cst_86 : f32 to vector<1x128xf32>
      %453 = arith.divf %452, %451 : vector<1x128xf32>
      %454 = vector.broadcast %8 : vector<4x1xf32> to vector<4x128xf32>
      %455 = arith.mulf %449, %454 : vector<4x128xf32>
      %cst_87 = arith.constant dense<0.000000e+00> : vector<128xf32>
      %456 = vector.multi_reduction <add>, %455, %cst_87 [0] : vector<4x128xf32> to vector<128xf32>
      %457 = vector.shape_cast %456 : vector<128xf32> to vector<1x128xf32>
      %458 = arith.mulf %453, %457 : vector<1x128xf32>
      %459 = arith.subf %428, %458 : vector<1x128xf32>
      %460 = vector.broadcast %9 : vector<4x1xf32> to vector<4x128xf32>
      %461 = arith.mulf %449, %460 : vector<4x128xf32>
      %cst_88 = arith.constant dense<0.000000e+00> : vector<128xf32>
      %462 = vector.multi_reduction <add>, %461, %cst_88 [0] : vector<4x128xf32> to vector<128xf32>
      %463 = vector.shape_cast %462 : vector<128xf32> to vector<1x128xf32>
      %464 = arith.mulf %453, %463 : vector<1x128xf32>
      %465 = arith.subf %429, %464 : vector<1x128xf32>
      %466 = vector.broadcast %10 : vector<4x1xf32> to vector<4x128xf32>
      %467 = arith.mulf %449, %466 : vector<4x128xf32>
      %cst_89 = arith.constant dense<0.000000e+00> : vector<128xf32>
      %468 = vector.multi_reduction <add>, %467, %cst_89 [0] : vector<4x128xf32> to vector<128xf32>
      %469 = vector.shape_cast %468 : vector<128xf32> to vector<1x128xf32>
      %470 = arith.mulf %453, %469 : vector<1x128xf32>
      %471 = arith.subf %431, %470 : vector<1x128xf32>
      %cst_90 = arith.constant 2.000000e+00 : f32
      %472 = vector.broadcast %cst_90 : f32 to vector<1x128xf32>
      %473 = arith.mulf %472, %422 : vector<1x128xf32>
      %474 = arith.mulf %459, %473 : vector<1x128xf32>
      %cst_91 = arith.constant 2.000000e+00 : f32
      %475 = vector.broadcast %cst_91 : f32 to vector<1x128xf32>
      %476 = arith.mulf %475, %422 : vector<1x128xf32>
      %477 = arith.mulf %476, %426 : vector<1x128xf32>
      %478 = arith.mulf %465, %477 : vector<1x128xf32>
      %479 = arith.addf %474, %478 : vector<1x128xf32>
      %cst_92 = arith.constant 3.000000e+00 : f32
      %480 = vector.broadcast %cst_92 : f32 to vector<1x128xf32>
      %481 = arith.mulf %480, %425 : vector<1x128xf32>
      %482 = arith.mulf %481, %424 : vector<1x128xf32>
      %483 = arith.mulf %426, %424 : vector<1x128xf32>
      %484 = arith.subf %482, %483 : vector<1x128xf32>
      %485 = arith.mulf %471, %484 : vector<1x128xf32>
      %486 = arith.addf %479, %485 : vector<1x128xf32>
      %cst_93 = arith.constant 2.000000e+00 : f32
      %487 = vector.broadcast %cst_93 : f32 to vector<1x128xf32>
      %488 = arith.mulf %487, %424 : vector<1x128xf32>
      %489 = arith.mulf %459, %488 : vector<1x128xf32>
      %cst_94 = arith.constant 2.000000e+00 : f32
      %490 = vector.broadcast %cst_94 : f32 to vector<1x128xf32>
      %491 = arith.mulf %490, %425 : vector<1x128xf32>
      %492 = arith.mulf %491, %424 : vector<1x128xf32>
      %493 = arith.mulf %465, %492 : vector<1x128xf32>
      %494 = arith.addf %489, %493 : vector<1x128xf32>
      %495 = arith.mulf %425, %422 : vector<1x128xf32>
      %cst_95 = arith.constant 3.000000e+00 : f32
      %496 = vector.broadcast %cst_95 : f32 to vector<1x128xf32>
      %497 = arith.mulf %496, %422 : vector<1x128xf32>
      %498 = arith.mulf %497, %426 : vector<1x128xf32>
      %499 = arith.subf %495, %498 : vector<1x128xf32>
      %500 = arith.mulf %471, %499 : vector<1x128xf32>
      %501 = arith.addf %494, %500 : vector<1x128xf32>
      %502 = arith.mulf %17, %486 : vector<1x128xf32>
      %503 = arith.subf %422, %502 : vector<1x128xf32>
      %504 = arith.mulf %19, %501 : vector<1x128xf32>
      %505 = arith.subf %424, %504 : vector<1x128xf32>
      %506 = arith.mulf %503, %503 : vector<1x128xf32>
      %507 = arith.mulf %505, %505 : vector<1x128xf32>
      %508 = arith.mulf %503, %505 : vector<1x128xf32>
      %509 = arith.addf %506, %507 : vector<1x128xf32>
      %510 = arith.mulf %506, %507 : vector<1x128xf32>
      %511 = arith.subf %506, %507 : vector<1x128xf32>
      %512 = arith.mulf %508, %511 : vector<1x128xf32>
      %513 = vector.broadcast %509 : vector<1x128xf32> to vector<4x128xf32>
      %514 = vector.broadcast %8 : vector<4x1xf32> to vector<4x128xf32>
      %515 = arith.mulf %513, %514 : vector<4x128xf32>
      %516 = vector.broadcast %510 : vector<1x128xf32> to vector<4x128xf32>
      %517 = vector.broadcast %9 : vector<4x1xf32> to vector<4x128xf32>
      %518 = arith.mulf %516, %517 : vector<4x128xf32>
      %519 = arith.addf %515, %518 : vector<4x128xf32>
      %520 = vector.broadcast %512 : vector<1x128xf32> to vector<4x128xf32>
      %521 = vector.broadcast %10 : vector<4x1xf32> to vector<4x128xf32>
      %522 = arith.mulf %520, %521 : vector<4x128xf32>
      %523 = arith.addf %519, %522 : vector<4x128xf32>
      %cst_96 = arith.constant 1.000000e+00 : f32
      %524 = vector.broadcast %cst_96 : f32 to vector<4x128xf32>
      %525 = arith.mulf %524, %523 : vector<4x128xf32>
      %cst_97 = arith.constant dense<0xFF800000> : vector<128xf32>
      %526 = vector.multi_reduction <maximumf>, %525, %cst_97 [0] : vector<4x128xf32> to vector<128xf32>
      %527 = vector.shape_cast %526 : vector<128xf32> to vector<1x128xf32>
      %528 = vector.broadcast %527 : vector<1x128xf32> to vector<4x128xf32>
      %529 = arith.subf %525, %528 : vector<4x128xf32>
      %530 = math.exp %529 : vector<4x128xf32>
      %cst_98 = arith.constant dense<0.000000e+00> : vector<128xf32>
      %531 = vector.multi_reduction <add>, %530, %cst_98 [0] : vector<4x128xf32> to vector<128xf32>
      %532 = vector.shape_cast %531 : vector<128xf32> to vector<1x128xf32>
      %cst_99 = arith.constant 1.000000e+00 : f32
      %533 = vector.broadcast %cst_99 : f32 to vector<1x128xf32>
      %534 = arith.divf %533, %532 : vector<1x128xf32>
      %535 = vector.broadcast %8 : vector<4x1xf32> to vector<4x128xf32>
      %536 = arith.mulf %530, %535 : vector<4x128xf32>
      %cst_100 = arith.constant dense<0.000000e+00> : vector<128xf32>
      %537 = vector.multi_reduction <add>, %536, %cst_100 [0] : vector<4x128xf32> to vector<128xf32>
      %538 = vector.shape_cast %537 : vector<128xf32> to vector<1x128xf32>
      %539 = arith.mulf %534, %538 : vector<1x128xf32>
      %540 = arith.subf %509, %539 : vector<1x128xf32>
      %541 = vector.broadcast %9 : vector<4x1xf32> to vector<4x128xf32>
      %542 = arith.mulf %530, %541 : vector<4x128xf32>
      %cst_101 = arith.constant dense<0.000000e+00> : vector<128xf32>
      %543 = vector.multi_reduction <add>, %542, %cst_101 [0] : vector<4x128xf32> to vector<128xf32>
      %544 = vector.shape_cast %543 : vector<128xf32> to vector<1x128xf32>
      %545 = arith.mulf %534, %544 : vector<1x128xf32>
      %546 = arith.subf %510, %545 : vector<1x128xf32>
      %547 = vector.broadcast %10 : vector<4x1xf32> to vector<4x128xf32>
      %548 = arith.mulf %530, %547 : vector<4x128xf32>
      %cst_102 = arith.constant dense<0.000000e+00> : vector<128xf32>
      %549 = vector.multi_reduction <add>, %548, %cst_102 [0] : vector<4x128xf32> to vector<128xf32>
      %550 = vector.shape_cast %549 : vector<128xf32> to vector<1x128xf32>
      %551 = arith.mulf %534, %550 : vector<1x128xf32>
      %552 = arith.subf %512, %551 : vector<1x128xf32>
      %cst_103 = arith.constant 2.000000e+00 : f32
      %553 = vector.broadcast %cst_103 : f32 to vector<1x128xf32>
      %554 = arith.mulf %553, %503 : vector<1x128xf32>
      %555 = arith.mulf %540, %554 : vector<1x128xf32>
      %cst_104 = arith.constant 2.000000e+00 : f32
      %556 = vector.broadcast %cst_104 : f32 to vector<1x128xf32>
      %557 = arith.mulf %556, %503 : vector<1x128xf32>
      %558 = arith.mulf %557, %507 : vector<1x128xf32>
      %559 = arith.mulf %546, %558 : vector<1x128xf32>
      %560 = arith.addf %555, %559 : vector<1x128xf32>
      %cst_105 = arith.constant 3.000000e+00 : f32
      %561 = vector.broadcast %cst_105 : f32 to vector<1x128xf32>
      %562 = arith.mulf %561, %506 : vector<1x128xf32>
      %563 = arith.mulf %562, %505 : vector<1x128xf32>
      %564 = arith.mulf %507, %505 : vector<1x128xf32>
      %565 = arith.subf %563, %564 : vector<1x128xf32>
      %566 = arith.mulf %552, %565 : vector<1x128xf32>
      %567 = arith.addf %560, %566 : vector<1x128xf32>
      %cst_106 = arith.constant 2.000000e+00 : f32
      %568 = vector.broadcast %cst_106 : f32 to vector<1x128xf32>
      %569 = arith.mulf %568, %505 : vector<1x128xf32>
      %570 = arith.mulf %540, %569 : vector<1x128xf32>
      %cst_107 = arith.constant 2.000000e+00 : f32
      %571 = vector.broadcast %cst_107 : f32 to vector<1x128xf32>
      %572 = arith.mulf %571, %506 : vector<1x128xf32>
      %573 = arith.mulf %572, %505 : vector<1x128xf32>
      %574 = arith.mulf %546, %573 : vector<1x128xf32>
      %575 = arith.addf %570, %574 : vector<1x128xf32>
      %576 = arith.mulf %506, %503 : vector<1x128xf32>
      %cst_108 = arith.constant 3.000000e+00 : f32
      %577 = vector.broadcast %cst_108 : f32 to vector<1x128xf32>
      %578 = arith.mulf %577, %503 : vector<1x128xf32>
      %579 = arith.mulf %578, %507 : vector<1x128xf32>
      %580 = arith.subf %576, %579 : vector<1x128xf32>
      %581 = arith.mulf %552, %580 : vector<1x128xf32>
      %582 = arith.addf %575, %581 : vector<1x128xf32>
      %583 = arith.mulf %17, %567 : vector<1x128xf32>
      %584 = arith.subf %503, %583 : vector<1x128xf32>
      %585 = arith.mulf %19, %582 : vector<1x128xf32>
      %586 = arith.subf %505, %585 : vector<1x128xf32>
      %587 = arith.mulf %584, %584 : vector<1x128xf32>
      %588 = arith.mulf %586, %586 : vector<1x128xf32>
      %589 = arith.mulf %584, %586 : vector<1x128xf32>
      %590 = arith.addf %587, %588 : vector<1x128xf32>
      %591 = arith.mulf %587, %588 : vector<1x128xf32>
      %592 = arith.subf %587, %588 : vector<1x128xf32>
      %593 = arith.mulf %589, %592 : vector<1x128xf32>
      %594 = vector.broadcast %590 : vector<1x128xf32> to vector<4x128xf32>
      %595 = vector.broadcast %8 : vector<4x1xf32> to vector<4x128xf32>
      %596 = arith.mulf %594, %595 : vector<4x128xf32>
      %597 = vector.broadcast %591 : vector<1x128xf32> to vector<4x128xf32>
      %598 = vector.broadcast %9 : vector<4x1xf32> to vector<4x128xf32>
      %599 = arith.mulf %597, %598 : vector<4x128xf32>
      %600 = arith.addf %596, %599 : vector<4x128xf32>
      %601 = vector.broadcast %593 : vector<1x128xf32> to vector<4x128xf32>
      %602 = vector.broadcast %10 : vector<4x1xf32> to vector<4x128xf32>
      %603 = arith.mulf %601, %602 : vector<4x128xf32>
      %604 = arith.addf %600, %603 : vector<4x128xf32>
      %cst_109 = arith.constant 1.000000e+00 : f32
      %605 = vector.broadcast %cst_109 : f32 to vector<4x128xf32>
      %606 = arith.mulf %605, %604 : vector<4x128xf32>
      %cst_110 = arith.constant dense<0xFF800000> : vector<128xf32>
      %607 = vector.multi_reduction <maximumf>, %606, %cst_110 [0] : vector<4x128xf32> to vector<128xf32>
      %608 = vector.shape_cast %607 : vector<128xf32> to vector<1x128xf32>
      %609 = vector.broadcast %608 : vector<1x128xf32> to vector<4x128xf32>
      %610 = arith.subf %606, %609 : vector<4x128xf32>
      %611 = math.exp %610 : vector<4x128xf32>
      %cst_111 = arith.constant dense<0.000000e+00> : vector<128xf32>
      %612 = vector.multi_reduction <add>, %611, %cst_111 [0] : vector<4x128xf32> to vector<128xf32>
      %613 = vector.shape_cast %612 : vector<128xf32> to vector<1x128xf32>
      %cst_112 = arith.constant 1.000000e+00 : f32
      %614 = vector.broadcast %cst_112 : f32 to vector<1x128xf32>
      %615 = arith.divf %614, %613 : vector<1x128xf32>
      %616 = vector.broadcast %8 : vector<4x1xf32> to vector<4x128xf32>
      %617 = arith.mulf %611, %616 : vector<4x128xf32>
      %cst_113 = arith.constant dense<0.000000e+00> : vector<128xf32>
      %618 = vector.multi_reduction <add>, %617, %cst_113 [0] : vector<4x128xf32> to vector<128xf32>
      %619 = vector.shape_cast %618 : vector<128xf32> to vector<1x128xf32>
      %620 = arith.mulf %615, %619 : vector<1x128xf32>
      %621 = arith.subf %590, %620 : vector<1x128xf32>
      %622 = vector.broadcast %9 : vector<4x1xf32> to vector<4x128xf32>
      %623 = arith.mulf %611, %622 : vector<4x128xf32>
      %cst_114 = arith.constant dense<0.000000e+00> : vector<128xf32>
      %624 = vector.multi_reduction <add>, %623, %cst_114 [0] : vector<4x128xf32> to vector<128xf32>
      %625 = vector.shape_cast %624 : vector<128xf32> to vector<1x128xf32>
      %626 = arith.mulf %615, %625 : vector<1x128xf32>
      %627 = arith.subf %591, %626 : vector<1x128xf32>
      %628 = vector.broadcast %10 : vector<4x1xf32> to vector<4x128xf32>
      %629 = arith.mulf %611, %628 : vector<4x128xf32>
      %cst_115 = arith.constant dense<0.000000e+00> : vector<128xf32>
      %630 = vector.multi_reduction <add>, %629, %cst_115 [0] : vector<4x128xf32> to vector<128xf32>
      %631 = vector.shape_cast %630 : vector<128xf32> to vector<1x128xf32>
      %632 = arith.mulf %615, %631 : vector<1x128xf32>
      %633 = arith.subf %593, %632 : vector<1x128xf32>
      %cst_116 = arith.constant 2.000000e+00 : f32
      %634 = vector.broadcast %cst_116 : f32 to vector<1x128xf32>
      %635 = arith.mulf %634, %584 : vector<1x128xf32>
      %636 = arith.mulf %621, %635 : vector<1x128xf32>
      %cst_117 = arith.constant 2.000000e+00 : f32
      %637 = vector.broadcast %cst_117 : f32 to vector<1x128xf32>
      %638 = arith.mulf %637, %584 : vector<1x128xf32>
      %639 = arith.mulf %638, %588 : vector<1x128xf32>
      %640 = arith.mulf %627, %639 : vector<1x128xf32>
      %641 = arith.addf %636, %640 : vector<1x128xf32>
      %cst_118 = arith.constant 3.000000e+00 : f32
      %642 = vector.broadcast %cst_118 : f32 to vector<1x128xf32>
      %643 = arith.mulf %642, %587 : vector<1x128xf32>
      %644 = arith.mulf %643, %586 : vector<1x128xf32>
      %645 = arith.mulf %588, %586 : vector<1x128xf32>
      %646 = arith.subf %644, %645 : vector<1x128xf32>
      %647 = arith.mulf %633, %646 : vector<1x128xf32>
      %648 = arith.addf %641, %647 : vector<1x128xf32>
      %cst_119 = arith.constant 2.000000e+00 : f32
      %649 = vector.broadcast %cst_119 : f32 to vector<1x128xf32>
      %650 = arith.mulf %649, %586 : vector<1x128xf32>
      %651 = arith.mulf %621, %650 : vector<1x128xf32>
      %cst_120 = arith.constant 2.000000e+00 : f32
      %652 = vector.broadcast %cst_120 : f32 to vector<1x128xf32>
      %653 = arith.mulf %652, %587 : vector<1x128xf32>
      %654 = arith.mulf %653, %586 : vector<1x128xf32>
      %655 = arith.mulf %627, %654 : vector<1x128xf32>
      %656 = arith.addf %651, %655 : vector<1x128xf32>
      %657 = arith.mulf %587, %584 : vector<1x128xf32>
      %cst_121 = arith.constant 3.000000e+00 : f32
      %658 = vector.broadcast %cst_121 : f32 to vector<1x128xf32>
      %659 = arith.mulf %658, %584 : vector<1x128xf32>
      %660 = arith.mulf %659, %588 : vector<1x128xf32>
      %661 = arith.subf %657, %660 : vector<1x128xf32>
      %662 = arith.mulf %633, %661 : vector<1x128xf32>
      %663 = arith.addf %656, %662 : vector<1x128xf32>
      %664 = arith.mulf %17, %648 : vector<1x128xf32>
      %665 = arith.subf %584, %664 : vector<1x128xf32>
      %666 = arith.mulf %19, %663 : vector<1x128xf32>
      %667 = arith.subf %586, %666 : vector<1x128xf32>
      %668 = arith.subf %665, %584 : vector<1x128xf32>
      %669 = math.absf %668 : vector<1x128xf32>
      %670 = arith.subf %667, %586 : vector<1x128xf32>
      %671 = math.absf %670 : vector<1x128xf32>
      %672 = arith.maximumf %669, %671 : vector<1x128xf32>
      %673 = vector.shape_cast %672 : vector<1x128xf32> to vector<1x1x128xf32>
      %cst_122 = arith.constant dense<0xFF800000> : vector<1xf32>
      %674 = vector.multi_reduction <maximumf>, %673, %cst_122 [1, 2] : vector<1x1x128xf32> to vector<1xf32>
      %675 = vector.shape_cast %674 : vector<1xf32> to vector<1x1x1xf32>
      %676 = vector.extract %675[0, 0, 0] : f32 from vector<1x1x1xf32>
      %cst_123 = arith.constant 9.99999997E-7 : f32
      %677 = arith.cmpf olt, %676, %cst_123 : f32
      %678 = arith.extui %677 : i1 to i32
      %679 = arith.sitofp %678 : i32 to f32
      %680 = arith.maximumf %arg8, %679 : f32
      scf.yield %665, %667, %680 : vector<1x128xf32>, vector<1x128xf32>, f32
    }
    %c0_13 = arith.constant 0 : index
    %c0_14 = arith.constant 0 : index
    %13 = vector.load %arg4[%c0_13, %c0_14] : memref<2x128xf32, #tpu.memory_space<vmem>>, vector<1x128xf32>
    tpu.vector_store %arg4[%c0_13, %c0_14], %12#0 {strides = array<i32>} : memref<2x128xf32, #tpu.memory_space<vmem>>, vector<1x128xf32>,
    %c1_15 = arith.constant 1 : index
    %c0_16 = arith.constant 0 : index
    %14 = vector.load %arg4[%c1_15, %c0_16] : memref<2x128xf32, #tpu.memory_space<vmem>>, vector<1x128xf32>
    tpu.vector_store %arg4[%c1_15, %c0_16], %12#1 {strides = array<i32>} : memref<2x128xf32, #tpu.memory_space<vmem>>, vector<1x128xf32>,
    return
  }
  func.func @transform_0(%arg0: i32) -> (i32, i32) {
    %c0_i32 = arith.constant 0 : i32
    %c0_i32_0 = arith.constant 0 : i32
    return %c0_i32, %arg0 : i32, i32
  }
  func.func @transform_1(%arg0: i32) -> (i32, i32) {
    %c0_i32 = arith.constant 0 : i32
    %c0_i32_0 = arith.constant 0 : i32
    %c0_i32_1 = arith.constant 0 : i32
    return %c0_i32, %c0_i32_0 : i32, i32
  }
  func.func @transform_2(%arg0: i32) -> (i32, i32) {
    %c0_i32 = arith.constant 0 : i32
    %c0_i32_0 = arith.constant 0 : i32
    return %c0_i32, %arg0 : i32, i32
  }
  func.func @transform_3(%arg0: i32) -> (i32, i32) {
    %c0_i32 = arith.constant 0 : i32
    %c0_i32_0 = arith.constant 0 : i32
    return %c0_i32, %arg0 : i32, i32
  }
}

</mosaic_0001>

<llo_original>
// kernel: tpu_custom_call.1
$region0: #{tpu_custom_call.1}
  #allocation0 [shape = 'u32[]', space=smem, size = 0x4, offset = 0x4, fixed_abs, tag = 'smem constant byte address 0x4 - core index']
  #allocation1 [shape = 'u32[144,128]{1,0:T(1,128)}', space=vmem, size = 0x12000, scoped, tag = 'internal scratch']
  %s0 = inlined_call_operand.hbm [shape: f32[2,128], index: 0, kind: input, shape index: {}]
  %s1 = inlined_call_operand.hbm [shape: f32[4,3], index: 1, kind: input, shape index: {}]
  %s2 = inlined_call_operand.vmem [shape: f32[2,128], index: 2, kind: input, shape index: {}]
  %s3 = inlined_call_operand.hbm [shape: f32[2,128], index: 3, kind: output, shape index: {}]
  %s4 = sld [smem:[#allocation0]]
  $region37: #{tpu_custom_call.1} parent=0
    _
  %s6 = ssub.s32 1, %s4
  %s7 = scalar_select 0, %s6, %s4
  $region1: #{tpu_custom_call.1} parent=0
    #allocation2 [shape = 'u8[1024]{0}', space=vmem, size = 0x400, scoped, tag = 'input window, operand 0, single buffered']
    #allocation3 [shape = 's32[1]{0}', space=sflag, size = 0x4, scoped, tag = 'scoped memory for tpu_custom_call.1']
    #allocation4 [shape = 's32[1]{0}', space=sflag, size = 0x4, scoped, tag = 'scoped memory for tpu_custom_call.1']
    #allocation5 [shape = 'u8[2048]{0}', space=vmem, size = 0x800, scoped, tag = 'input window, operand 1, single buffered']
    #allocation6 [shape = 's32[1]{0}', space=sflag, size = 0x4, scoped, tag = 'scoped memory for tpu_custom_call.1']
    #allocation7 [shape = 'u8[1024]{0}', space=vmem, size = 0x400, scoped, tag = 'output window, operand 0, single buffered']
    %8 = vsyncpa [#allocation3], 0
    %9 = vsyncpa [#allocation6], 0
    %10 = vsyncpa [#allocation4], 0
    // Predicated region
    $region2: #{tpu_custom_call.1} parent=1 // pred_check
      _
    $region3: #{tpu_custom_call.1} parent=1 // pred_check_branch
      %12 = sbr.rel (0) target = $region5
    $region4: #{tpu_custom_call.1} parent=1 // pred_region
      %s14 = ssub.s32 32, 32
      %15 = vsyncadd [#allocation3], %s14
      %s17 = sshll.u32 [#allocation2], 4
      %s18 = int_to_ptr.vmem [resolvable:$true] %s17
      %20 = dma.hbm_to_vmem [thread:$0]  %s0, 32, %s18, [#allocation3]
    $region5: #{tpu_custom_call.1} parent=1 // pred_fallthru
      _
    // Predicated region
    $region6: #{tpu_custom_call.1} parent=1 // pred_check
      _
    $region7: #{tpu_custom_call.1} parent=1 // pred_check_branch
      %22 = sbr.rel (0) target = $region9
    $region8: #{tpu_custom_call.1} parent=1 // pred_region
      %s24 = ssub.s32 64, 64
      %25 = vsyncadd [#allocation6], %s24
      %s27 = sshll.u32 [#allocation5], 4
      %s28 = int_to_ptr.vmem [resolvable:$true] %s27
      %30 = dma.hbm_to_vmem [thread:$0]  %s1, 64, %s28, [#allocation6]
    $region9: #{tpu_custom_call.1} parent=1 // pred_fallthru
      _
    // Predicated region
    $region10: #{tpu_custom_call.1} parent=1 // pred_check
      _
    $region11: #{tpu_custom_call.1} parent=1 // pred_check_branch
      %32 = sbr.rel (0) target = $region13
    $region12: #{tpu_custom_call.1} parent=1 // pred_region
      _
    $region13: #{tpu_custom_call.1} parent=1 // pred_fallthru
      _
    // Predicated region
    $region14: #{tpu_custom_call.1} parent=1 // pred_check
      _
    $region15: #{tpu_custom_call.1} parent=1 // pred_check_branch
      %34 = sbr.rel (0) target = $region17
    $region16: #{tpu_custom_call.1} parent=1 // pred_region
      %35 = dma.done [#allocation3], 32
    $region17: #{tpu_custom_call.1} parent=1 // pred_fallthru
      _
    // Predicated region
    $region18: #{tpu_custom_call.1} parent=1 // pred_check
      _
    $region19: #{tpu_custom_call.1} parent=1 // pred_check_branch
      %37 = sbr.rel (0) target = $region21
    $region20: #{tpu_custom_call.1} parent=1 // pred_region
      %38 = dma.done [#allocation6], 64
    $region21: #{tpu_custom_call.1} parent=1 // pred_fallthru
      _
    %v39 = vld [vmem:[#allocation2] sm:$0x1]
    %v40 = vld [vmem:[#allocation2 + $0x1] sm:$0x1]
    %v41 = vld [vmem:[%s2] sm:$0x1]
    %v42 = vmul.f32 %v41, 0.01
    %v43 = vld [vmem:[%s2 + $0x1] sm:$0x1]
    %v44 = vmul.f32 %v43, 0.01
    %v45 = vld [vmem:[#allocation5] sm:$0xf]
    loop: start=0, step=1, limit=125
    $region22: #{tpu_custom_call.1} parent=1 // loop_pre_header
      _
    $region23: #{tpu_custom_call.1} parent=1 // loop_header
      %s47 = sphi 0, %s51
      %p48 = scmp.ge.s32.totalorder %s47, 125
      %v52 = vphi %v39, %v870
      %v53 = vphi %v40, %v872
      %s54 = sphi 0.0, %s892
    $region24: #{tpu_custom_call.1} parent=1 // loop_header_branch
      %50 = sbr.rel (%p48) target = $region28
    $region25: #{tpu_custom_call.1} parent=1 // loop_body
      %s55 = ssub.f32 1.0, %s54
      %v56 = vstv %s55
      %v57 = vmul.f32 %v42, %v56
      %v58 = vmul.f32 %v44, %v56
      %v59 = vmul.f32 %v52, %v52
      %v60 = vmul.f32 %v53, %v53
      %v61 = vmul.f32 %v52, %v53
      %v62 = vadd.f32 %v59, %v60
      %v63 = vmul.f32 %v59, %v60
      %v64 = vsub.f32 %v59, %v60
      %v65 = vmul.f32 %v61, %v64
      %v66 = vlaneseq
      %v67 = vshrl.u32 %v66, 7
      %v68 = vsub.s32 0, %v67
      %v69 = vrot.slane %v62, %v68
      %71 = vset.pattern.permute.xlu0 0
      %72 = vperm.xlu0 %71, %v45
      %v73 = vpop.permute.xlu0 %72
      %v75 = vmul.f32 %v69, %v73
      %v76 = vlaneseq
      %v77 = vshrl.u32 %v76, 7
      %v78 = vsub.s32 0, %v77
      %v79 = vrot.slane %v63, %v78
      %80 = vset.pattern.permute.xlu0 1
      %81 = vperm.xlu0 %80, %v45
      %v82 = vpop.permute.xlu0 %81
      %v84 = vmul.f32 %v79, %v82
      %v85 = vadd.f32 %v75, %v84
      %v86 = vlaneseq
      %v87 = vshrl.u32 %v86, 7
      %v88 = vsub.s32 0, %v87
      %v89 = vrot.slane %v65, %v88
      %90 = vset.pattern.permute.xlu0 2
      %91 = vperm.xlu0 %90, %v45
      %v92 = vpop.permute.xlu0 %91
      %v94 = vmul.f32 %v89, %v92
      %v95 = vadd.f32 %v85, %v94
      %vm96 = vcmask 1043456
      %v97 = vsel %vm96, %v95, -inf
      %v98 = vrot.slane %v97, 4
      %v99 = vmax.f32 %v97, %v98
      %v100 = vrot.slane %v99, 2
      %v101 = vmax.f32 %v99, %v100
      %v102 = vrot.slane %v101, 1
      %v103 = vmax.f32 %v101, %v102
      %v104 = vsub.f32 %v95, %v103
      %v105 = vmul.f32 %v104, 1.442695
      %v106 = vpow.pop %v105
      %v107 = vsel %vm96, %v106, 0.0
      %v108 = vrot.slane %v107, 4
      %v109 = vadd.f32 %v107, %v108
      %v110 = vrot.slane %v109, 2
      %v111 = vadd.f32 %v109, %v110
      %v112 = vrot.slane %v111, 1
      %v113 = vadd.f32 %v111, %v112
      %v114 = vrcp.pop %v113
      %v115 = vmul.f32 1.0, %v114
      %v116 = vmul.f32 %v106, %v73
      %v117 = vsel %vm96, %v116, 0.0
      %v118 = vrot.slane %v117, 4
      %v119 = vadd.f32 %v117, %v118
      %v120 = vrot.slane %v119, 2
      %v121 = vadd.f32 %v119, %v120
      %v122 = vrot.slane %v121, 1
      %v123 = vadd.f32 %v121, %v122
      %v124 = vmul.f32 %v115, %v123
      %v125 = vsub.f32 %v62, %v124
      %v126 = vmul.f32 %v106, %v82
      %v127 = vsel %vm96, %v126, 0.0
      %v128 = vrot.slane %v127, 4
      %v129 = vadd.f32 %v127, %v128
      %v130 = vrot.slane %v129, 2
      %v131 = vadd.f32 %v129, %v130
      %v132 = vrot.slane %v131, 1
      %v133 = vadd.f32 %v131, %v132
      %v134 = vmul.f32 %v115, %v133
      %v135 = vsub.f32 %v63, %v134
      %v136 = vmul.f32 %v106, %v92
      %v137 = vsel %vm96, %v136, 0.0
      %v138 = vrot.slane %v137, 4
      %v139 = vadd.f32 %v137, %v138
      %v140 = vrot.slane %v139, 2
      %v141 = vadd.f32 %v139, %v140
      %v142 = vrot.slane %v141, 1
      %v143 = vadd.f32 %v141, %v142
      %v144 = vmul.f32 %v115, %v143
      %v145 = vsub.f32 %v65, %v144
      %v146 = vmul.f32 %v52, 2.0
      %v147 = vmul.f32 %v125, %v146
      %v148 = vmul.f32 %v146, %v60
      %v149 = vmul.f32 %v135, %v148
      %v150 = vadd.f32 %v147, %v149
      %v151 = vmul.f32 %v59, 3.0
      %v152 = vmul.f32 %v151, %v53
      %v153 = vmul.f32 %v60, %v53
      %v154 = vsub.f32 %v152, %v153
      %v155 = vmul.f32 %v145, %v154
      %v156 = vadd.f32 %v150, %v155
      %v157 = vmul.f32 %v53, 2.0
      %v158 = vmul.f32 %v125, %v157
      %v159 = vmul.f32 %v59, 2.0
      %v160 = vmul.f32 %v159, %v53
      %v161 = vmul.f32 %v135, %v160
      %v162 = vadd.f32 %v158, %v161
      %v163 = vmul.f32 %v59, %v52
      %v164 = vmul.f32 %v52, 3.0
      %v165 = vmul.f32 %v164, %v60
      %v166 = vsub.f32 %v163, %v165
      %v167 = vmul.f32 %v145, %v166
      %v168 = vadd.f32 %v162, %v167
      %v169 = vmul.f32 %v57, %v156
      %v170 = vsub.f32 %v52, %v169
      %v171 = vmul.f32 %v58, %v168
      %v172 = vsub.f32 %v53, %v171
      %v173 = vmul.f32 %v170, %v170
      %v174 = vmul.f32 %v172, %v172
      %v175 = vmul.f32 %v170, %v172
      %v176 = vadd.f32 %v173, %v174
      %v177 = vmul.f32 %v173, %v174
      %v178 = vsub.f32 %v173, %v174
      %v179 = vmul.f32 %v175, %v178
      %v180 = vlaneseq
      %v181 = vshrl.u32 %v180, 7
      %v182 = vsub.s32 0, %v181
      %v183 = vrot.slane %v176, %v182
      %v184 = vmul.f32 %v183, %v73
      %v185 = vlaneseq
      %v186 = vshrl.u32 %v185, 7
      %v187 = vsub.s32 0, %v186
      %v188 = vrot.slane %v177, %v187
      %v189 = vmul.f32 %v188, %v82
      %v190 = vadd.f32 %v184, %v189
      %v191 = vlaneseq
      %v192 = vshrl.u32 %v191, 7
      %v193 = vsub.s32 0, %v192
      %v194 = vrot.slane %v179, %v193
      %v195 = vmul.f32 %v194, %v92
      %v196 = vadd.f32 %v190, %v195
      %v197 = vsel %vm96, %v196, -inf
      %v198 = vrot.slane %v197, 4
      %v199 = vmax.f32 %v197, %v198
      %v200 = vrot.slane %v199, 2
      %v201 = vmax.f32 %v199, %v200
      %v202 = vrot.slane %v201, 1
      %v203 = vmax.f32 %v201, %v202
      %v204 = vsub.f32 %v196, %v203
      %v205 = vmul.f32 %v204, 1.442695
      %v206 = vpow.pop %v205
      %v207 = vsel %vm96, %v206, 0.0
      %v208 = vrot.slane %v207, 4
      %v209 = vadd.f32 %v207, %v208
      %v210 = vrot.slane %v209, 2
      %v211 = vadd.f32 %v209, %v210
      %v212 = vrot.slane %v211, 1
      %v213 = vadd.f32 %v211, %v212
      %v214 = vrcp.pop %v213
      %v215 = vmul.f32 1.0, %v214
      %v216 = vmul.f32 %v206, %v73
      %v217 = vsel %vm96, %v216, 0.0
      %v218 = vrot.slane %v217, 4
      %v219 = vadd.f32 %v217, %v218
      %v220 = vrot.slane %v219, 2
      %v221 = vadd.f32 %v219, %v220
      %v222 = vrot.slane %v221, 1
      %v223 = vadd.f32 %v221, %v222
      %v224 = vmul.f32 %v215, %v223
      %v225 = vsub.f32 %v176, %v224
      %v226 = vmul.f32 %v206, %v82
      %v227 = vsel %vm96, %v226, 0.0
      %v228 = vrot.slane %v227, 4
      %v229 = vadd.f32 %v227, %v228
      %v230 = vrot.slane %v229, 2
      %v231 = vadd.f32 %v229, %v230
      %v232 = vrot.slane %v231, 1
      %v233 = vadd.f32 %v231, %v232
      %v234 = vmul.f32 %v215, %v233
      %v235 = vsub.f32 %v177, %v234
      %v236 = vmul.f32 %v206, %v92
      %v237 = vsel %vm96, %v236, 0.0
      %v238 = vrot.slane %v237, 4
      %v239 = vadd.f32 %v237, %v238
      %v240 = vrot.slane %v239, 2
      %v241 = vadd.f32 %v239, %v240
      %v242 = vrot.slane %v241, 1
      %v243 = vadd.f32 %v241, %v242
      %v244 = vmul.f32 %v215, %v243
      %v245 = vsub.f32 %v179, %v244
      %v246 = vmul.f32 %v170, 2.0
      %v247 = vmul.f32 %v225, %v246
      %v248 = vmul.f32 %v246, %v174
      %v249 = vmul.f32 %v235, %v248
      %v250 = vadd.f32 %v247, %v249
      %v251 = vmul.f32 %v173, 3.0
      %v252 = vmul.f32 %v251, %v172
      %v253 = vmul.f32 %v174, %v172
      %v254 = vsub.f32 %v252, %v253
      %v255 = vmul.f32 %v245, %v254
      %v256 = vadd.f32 %v250, %v255
      %v257 = vmul.f32 %v172, 2.0
      %v258 = vmul.f32 %v225, %v257
      %v259 = vmul.f32 %v173, 2.0
      %v260 = vmul.f32 %v259, %v172
      %v261 = vmul.f32 %v235, %v260
      %v262 = vadd.f32 %v258, %v261
      %v263 = vmul.f32 %v173, %v170
      %v264 = vmul.f32 %v170, 3.0
      %v265 = vmul.f32 %v264, %v174
      %v266 = vsub.f32 %v263, %v265
      %v267 = vmul.f32 %v245, %v266
      %v268 = vadd.f32 %v262, %v267
      %v269 = vmul.f32 %v57, %v256
      %v270 = vsub.f32 %v170, %v269
      %v271 = vmul.f32 %v58, %v268
      %v272 = vsub.f32 %v172, %v271
      %v273 = vmul.f32 %v270, %v270
      %v274 = vmul.f32 %v272, %v272
      %v275 = vmul.f32 %v270, %v272
      %v276 = vadd.f32 %v273, %v274
      %v277 = vmul.f32 %v273, %v274
      %v278 = vsub.f32 %v273, %v274
      %v279 = vmul.f32 %v275, %v278
      %v280 = vlaneseq
      %v281 = vshrl.u32 %v280, 7
      %v282 = vsub.s32 0, %v281
      %v283 = vrot.slane %v276, %v282
      %v284 = vmul.f32 %v283, %v73
      %v285 = vlaneseq
      %v286 = vshrl.u32 %v285, 7
      %v287 = vsub.s32 0, %v286
      %v288 = vrot.slane %v277, %v287
      %v289 = vmul.f32 %v288, %v82
      %v290 = vadd.f32 %v284, %v289
      %v291 = vlaneseq
      %v292 = vshrl.u32 %v291, 7
      %v293 = vsub.s32 0, %v292
      %v294 = vrot.slane %v279, %v293
      %v295 = vmul.f32 %v294, %v92
      %v296 = vadd.f32 %v290, %v295
      %v297 = vsel %vm96, %v296, -inf
      %v298 = vrot.slane %v297, 4
      %v299 = vmax.f32 %v297, %v298
      %v300 = vrot.slane %v299, 2
      %v301 = vmax.f32 %v299, %v300
      %v302 = vrot.slane %v301, 1
      %v303 = vmax.f32 %v301, %v302
      %v304 = vsub.f32 %v296, %v303
      %v305 = vmul.f32 %v304, 1.442695
      %v306 = vpow.pop %v305
      %v307 = vsel %vm96, %v306, 0.0
      %v308 = vrot.slane %v307, 4
      %v309 = vadd.f32 %v307, %v308
      %v310 = vrot.slane %v309, 2
      %v311 = vadd.f32 %v309, %v310
      %v312 = vrot.slane %v311, 1
      %v313 = vadd.f32 %v311, %v312
      %v314 = vrcp.pop %v313
      %v315 = vmul.f32 1.0, %v314
      %v316 = vmul.f32 %v306, %v73
      %v317 = vsel %vm96, %v316, 0.0
      %v318 = vrot.slane %v317, 4
      %v319 = vadd.f32 %v317, %v318
      %v320 = vrot.slane %v319, 2
      %v321 = vadd.f32 %v319, %v320
      %v322 = vrot.slane %v321, 1
      %v323 = vadd.f32 %v321, %v322
      %v324 = vmul.f32 %v315, %v323
      %v325 = vsub.f32 %v276, %v324
      %v326 = vmul.f32 %v306, %v82
      %v327 = vsel %vm96, %v326, 0.0
      %v328 = vrot.slane %v327, 4
      %v329 = vadd.f32 %v327, %v328
      %v330 = vrot.slane %v329, 2
      %v331 = vadd.f32 %v329, %v330
      %v332 = vrot.slane %v331, 1
      %v333 = vadd.f32 %v331, %v332
      %v334 = vmul.f32 %v315, %v333
      %v335 = vsub.f32 %v277, %v334
      %v336 = vmul.f32 %v306, %v92
      %v337 = vsel %vm96, %v336, 0.0
      %v338 = vrot.slane %v337, 4
      %v339 = vadd.f32 %v337, %v338
      %v340 = vrot.slane %v339, 2
      %v341 = vadd.f32 %v339, %v340
      %v342 = vrot.slane %v341, 1
      %v343 = vadd.f32 %v341, %v342
      %v344 = vmul.f32 %v315, %v343
      %v345 = vsub.f32 %v279, %v344
      %v346 = vmul.f32 %v270, 2.0
      %v347 = vmul.f32 %v325, %v346
      %v348 = vmul.f32 %v346, %v274
      %v349 = vmul.f32 %v335, %v348
      %v350 = vadd.f32 %v347, %v349
      %v351 = vmul.f32 %v273, 3.0
      %v352 = vmul.f32 %v351, %v272
      %v353 = vmul.f32 %v274, %v272
      %v354 = vsub.f32 %v352, %v353
      %v355 = vmul.f32 %v345, %v354
      %v356 = vadd.f32 %v350, %v355
      %v357 = vmul.f32 %v272, 2.0
      %v358 = vmul.f32 %v325, %v357
      %v359 = vmul.f32 %v273, 2.0
      %v360 = vmul.f32 %v359, %v272
      %v361 = vmul.f32 %v335, %v360
      %v362 = vadd.f32 %v358, %v361
      %v363 = vmul.f32 %v273, %v270
      %v364 = vmul.f32 %v270, 3.0
      %v365 = vmul.f32 %v364, %v274
      %v366 = vsub.f32 %v363, %v365
      %v367 = vmul.f32 %v345, %v366
      %v368 = vadd.f32 %v362, %v367
      %v369 = vmul.f32 %v57, %v356
      %v370 = vsub.f32 %v270, %v369
      %v371 = vmul.f32 %v58, %v368
      %v372 = vsub.f32 %v272, %v371
      %v373 = vmul.f32 %v370, %v370
      %v374 = vmul.f32 %v372, %v372
      %v375 = vmul.f32 %v370, %v372
      %v376 = vadd.f32 %v373, %v374
      %v377 = vmul.f32 %v373, %v374
      %v378 = vsub.f32 %v373, %v374
      %v379 = vmul.f32 %v375, %v378
      %v380 = vlaneseq
      %v381 = vshrl.u32 %v380, 7
      %v382 = vsub.s32 0, %v381
      %v383 = vrot.slane %v376, %v382
      %v384 = vmul.f32 %v383, %v73
      %v385 = vlaneseq
      %v386 = vshrl.u32 %v385, 7
      %v387 = vsub.s32 0, %v386
      %v388 = vrot.slane %v377, %v387
      %v389 = vmul.f32 %v388, %v82
      %v390 = vadd.f32 %v384, %v389
      %v391 = vlaneseq
      %v392 = vshrl.u32 %v391, 7
      %v393 = vsub.s32 0, %v392
      %v394 = vrot.slane %v379, %v393
      %v395 = vmul.f32 %v394, %v92
      %v396 = vadd.f32 %v390, %v395
      %v397 = vsel %vm96, %v396, -inf
      %v398 = vrot.slane %v397, 4
      %v399 = vmax.f32 %v397, %v398
      %v400 = vrot.slane %v399, 2
      %v401 = vmax.f32 %v399, %v400
      %v402 = vrot.slane %v401, 1
      %v403 = vmax.f32 %v401, %v402
      %v404 = vsub.f32 %v396, %v403
      %v405 = vmul.f32 %v404, 1.442695
      %v406 = vpow.pop %v405
      %v407 = vsel %vm96, %v406, 0.0
      %v408 = vrot.slane %v407, 4
      %v409 = vadd.f32 %v407, %v408
      %v410 = vrot.slane %v409, 2
      %v411 = vadd.f32 %v409, %v410
      %v412 = vrot.slane %v411, 1
      %v413 = vadd.f32 %v411, %v412
      %v414 = vrcp.pop %v413
      %v415 = vmul.f32 1.0, %v414
      %v416 = vmul.f32 %v406, %v73
      %v417 = vsel %vm96, %v416, 0.0
      %v418 = vrot.slane %v417, 4
      %v419 = vadd.f32 %v417, %v418
      %v420 = vrot.slane %v419, 2
      %v421 = vadd.f32 %v419, %v420
      %v422 = vrot.slane %v421, 1
      %v423 = vadd.f32 %v421, %v422
      %v424 = vmul.f32 %v415, %v423
      %v425 = vsub.f32 %v376, %v424
      %v426 = vmul.f32 %v406, %v82
      %v427 = vsel %vm96, %v426, 0.0
      %v428 = vrot.slane %v427, 4
      %v429 = vadd.f32 %v427, %v428
      %v430 = vrot.slane %v429, 2
      %v431 = vadd.f32 %v429, %v430
      %v432 = vrot.slane %v431, 1
      %v433 = vadd.f32 %v431, %v432
      %v434 = vmul.f32 %v415, %v433
      %v435 = vsub.f32 %v377, %v434
      %v436 = vmul.f32 %v406, %v92
      %v437 = vsel %vm96, %v436, 0.0
      %v438 = vrot.slane %v437, 4
      %v439 = vadd.f32 %v437, %v438
      %v440 = vrot.slane %v439, 2
      %v441 = vadd.f32 %v439, %v440
      %v442 = vrot.slane %v441, 1
      %v443 = vadd.f32 %v441, %v442
      %v444 = vmul.f32 %v415, %v443
      %v445 = vsub.f32 %v379, %v444
      %v446 = vmul.f32 %v370, 2.0
      %v447 = vmul.f32 %v425, %v446
      %v448 = vmul.f32 %v446, %v374
      %v449 = vmul.f32 %v435, %v448
      %v450 = vadd.f32 %v447, %v449
      %v451 = vmul.f32 %v373, 3.0
      %v452 = vmul.f32 %v451, %v372
      %v453 = vmul.f32 %v374, %v372
      %v454 = vsub.f32 %v452, %v453
      %v455 = vmul.f32 %v445, %v454
      %v456 = vadd.f32 %v450, %v455
      %v457 = vmul.f32 %v372, 2.0
      %v458 = vmul.f32 %v425, %v457
      %v459 = vmul.f32 %v373, 2.0
      %v460 = vmul.f32 %v459, %v372
      %v461 = vmul.f32 %v435, %v460
      %v462 = vadd.f32 %v458, %v461
      %v463 = vmul.f32 %v373, %v370
      %v464 = vmul.f32 %v370, 3.0
      %v465 = vmul.f32 %v464, %v374
      %v466 = vsub.f32 %v463, %v465
      %v467 = vmul.f32 %v445, %v466
      %v468 = vadd.f32 %v462, %v467
      %v469 = vmul.f32 %v57, %v456
      %v470 = vsub.f32 %v370, %v469
      %v471 = vmul.f32 %v58, %v468
      %v472 = vsub.f32 %v372, %v471
      %v473 = vmul.f32 %v470, %v470
      %v474 = vmul.f32 %v472, %v472
      %v475 = vmul.f32 %v470, %v472
      %v476 = vadd.f32 %v473, %v474
      %v477 = vmul.f32 %v473, %v474
      %v478 = vsub.f32 %v473, %v474
      %v479 = vmul.f32 %v475, %v478
      %v480 = vlaneseq
      %v481 = vshrl.u32 %v480, 7
      %v482 = vsub.s32 0, %v481
      %v483 = vrot.slane %v476, %v482
      %v484 = vmul.f32 %v483, %v73
      %v485 = vlaneseq
      %v486 = vshrl.u32 %v485, 7
      %v487 = vsub.s32 0, %v486
      %v488 = vrot.slane %v477, %v487
      %v489 = vmul.f32 %v488, %v82
      %v490 = vadd.f32 %v484, %v489
      %v491 = vlaneseq
      %v492 = vshrl.u32 %v491, 7
      %v493 = vsub.s32 0, %v492
      %v494 = vrot.slane %v479, %v493
      %v495 = vmul.f32 %v494, %v92
      %v496 = vadd.f32 %v490, %v495
      %v497 = vsel %vm96, %v496, -inf
      %v498 = vrot.slane %v497, 4
      %v499 = vmax.f32 %v497, %v498
      %v500 = vrot.slane %v499, 2
      %v501 = vmax.f32 %v499, %v500
      %v502 = vrot.slane %v501, 1
      %v503 = vmax.f32 %v501, %v502
      %v504 = vsub.f32 %v496, %v503
      %v505 = vmul.f32 %v504, 1.442695
      %v506 = vpow.pop %v505
      %v507 = vsel %vm96, %v506, 0.0
      %v508 = vrot.slane %v507, 4
      %v509 = vadd.f32 %v507, %v508
      %v510 = vrot.slane %v509, 2
      %v511 = vadd.f32 %v509, %v510
      %v512 = vrot.slane %v511, 1
      %v513 = vadd.f32 %v511, %v512
      %v514 = vrcp.pop %v513
      %v515 = vmul.f32 1.0, %v514
      %v516 = vmul.f32 %v506, %v73
      %v517 = vsel %vm96, %v516, 0.0
      %v518 = vrot.slane %v517, 4
      %v519 = vadd.f32 %v517, %v518
      %v520 = vrot.slane %v519, 2
      %v521 = vadd.f32 %v519, %v520
      %v522 = vrot.slane %v521, 1
      %v523 = vadd.f32 %v521, %v522
      %v524 = vmul.f32 %v515, %v523
      %v525 = vsub.f32 %v476, %v524
      %v526 = vmul.f32 %v506, %v82
      %v527 = vsel %vm96, %v526, 0.0
      %v528 = vrot.slane %v527, 4
      %v529 = vadd.f32 %v527, %v528
      %v530 = vrot.slane %v529, 2
      %v531 = vadd.f32 %v529, %v530
      %v532 = vrot.slane %v531, 1
      %v533 = vadd.f32 %v531, %v532
      %v534 = vmul.f32 %v515, %v533
      %v535 = vsub.f32 %v477, %v534
      %v536 = vmul.f32 %v506, %v92
      %v537 = vsel %vm96, %v536, 0.0
      %v538 = vrot.slane %v537, 4
      %v539 = vadd.f32 %v537, %v538
      %v540 = vrot.slane %v539, 2
      %v541 = vadd.f32 %v539, %v540
      %v542 = vrot.slane %v541, 1
      %v543 = vadd.f32 %v541, %v542
      %v544 = vmul.f32 %v515, %v543
      %v545 = vsub.f32 %v479, %v544
      %v546 = vmul.f32 %v470, 2.0
      %v547 = vmul.f32 %v525, %v546
      %v548 = vmul.f32 %v546, %v474
      %v549 = vmul.f32 %v535, %v548
      %v550 = vadd.f32 %v547, %v549
      %v551 = vmul.f32 %v473, 3.0
      %v552 = vmul.f32 %v551, %v472
      %v553 = vmul.f32 %v474, %v472
      %v554 = vsub.f32 %v552, %v553
      %v555 = vmul.f32 %v545, %v554
      %v556 = vadd.f32 %v550, %v555
      %v557 = vmul.f32 %v472, 2.0
      %v558 = vmul.f32 %v525, %v557
      %v559 = vmul.f32 %v473, 2.0
      %v560 = vmul.f32 %v559, %v472
      %v561 = vmul.f32 %v535, %v560
      %v562 = vadd.f32 %v558, %v561
      %v563 = vmul.f32 %v473, %v470
      %v564 = vmul.f32 %v470, 3.0
      %v565 = vmul.f32 %v564, %v474
      %v566 = vsub.f32 %v563, %v565
      %v567 = vmul.f32 %v545, %v566
      %v568 = vadd.f32 %v562, %v567
      %v569 = vmul.f32 %v57, %v556
      %v570 = vsub.f32 %v470, %v569
      %v571 = vmul.f32 %v58, %v568
      %v572 = vsub.f32 %v472, %v571
      %v573 = vmul.f32 %v570, %v570
      %v574 = vmul.f32 %v572, %v572
      %v575 = vmul.f32 %v570, %v572
      %v576 = vadd.f32 %v573, %v574
      %v577 = vmul.f32 %v573, %v574
      %v578 = vsub.f32 %v573, %v574
      %v579 = vmul.f32 %v575, %v578
      %v580 = vlaneseq
      %v581 = vshrl.u32 %v580, 7
      %v582 = vsub.s32 0, %v581
      %v583 = vrot.slane %v576, %v582
      %v584 = vmul.f32 %v583, %v73
      %v585 = vlaneseq
      %v586 = vshrl.u32 %v585, 7
      %v587 = vsub.s32 0, %v586
      %v588 = vrot.slane %v577, %v587
      %v589 = vmul.f32 %v588, %v82
      %v590 = vadd.f32 %v584, %v589
      %v591 = vlaneseq
      %v592 = vshrl.u32 %v591, 7
      %v593 = vsub.s32 0, %v592
      %v594 = vrot.slane %v579, %v593
      %v595 = vmul.f32 %v594, %v92
      %v596 = vadd.f32 %v590, %v595
      %v597 = vsel %vm96, %v596, -inf
      %v598 = vrot.slane %v597, 4
      %v599 = vmax.f32 %v597, %v598
      %v600 = vrot.slane %v599, 2
      %v601 = vmax.f32 %v599, %v600
      %v602 = vrot.slane %v601, 1
      %v603 = vmax.f32 %v601, %v602
      %v604 = vsub.f32 %v596, %v603
      %v605 = vmul.f32 %v604, 1.442695
      %v606 = vpow.pop %v605
      %v607 = vsel %vm96, %v606, 0.0
      %v608 = vrot.slane %v607, 4
      %v609 = vadd.f32 %v607, %v608
      %v610 = vrot.slane %v609, 2
      %v611 = vadd.f32 %v609, %v610
      %v612 = vrot.slane %v611, 1
      %v613 = vadd.f32 %v611, %v612
      %v614 = vrcp.pop %v613
      %v615 = vmul.f32 1.0, %v614
      %v616 = vmul.f32 %v606, %v73
      %v617 = vsel %vm96, %v616, 0.0
      %v618 = vrot.slane %v617, 4
      %v619 = vadd.f32 %v617, %v618
      %v620 = vrot.slane %v619, 2
      %v621 = vadd.f32 %v619, %v620
      %v622 = vrot.slane %v621, 1
      %v623 = vadd.f32 %v621, %v622
      %v624 = vmul.f32 %v615, %v623
      %v625 = vsub.f32 %v576, %v624
      %v626 = vmul.f32 %v606, %v82
      %v627 = vsel %vm96, %v626, 0.0
      %v628 = vrot.slane %v627, 4
      %v629 = vadd.f32 %v627, %v628
      %v630 = vrot.slane %v629, 2
      %v631 = vadd.f32 %v629, %v630
      %v632 = vrot.slane %v631, 1
      %v633 = vadd.f32 %v631, %v632
      %v634 = vmul.f32 %v615, %v633
      %v635 = vsub.f32 %v577, %v634
      %v636 = vmul.f32 %v606, %v92
      %v637 = vsel %vm96, %v636, 0.0
      %v638 = vrot.slane %v637, 4
      %v639 = vadd.f32 %v637, %v638
      %v640 = vrot.slane %v639, 2
      %v641 = vadd.f32 %v639, %v640
      %v642 = vrot.slane %v641, 1
      %v643 = vadd.f32 %v641, %v642
      %v644 = vmul.f32 %v615, %v643
      %v645 = vsub.f32 %v579, %v644
      %v646 = vmul.f32 %v570, 2.0
      %v647 = vmul.f32 %v625, %v646
      %v648 = vmul.f32 %v646, %v574
      %v649 = vmul.f32 %v635, %v648
      %v650 = vadd.f32 %v647, %v649
      %v651 = vmul.f32 %v573, 3.0
      %v652 = vmul.f32 %v651, %v572
      %v653 = vmul.f32 %v574, %v572
      %v654 = vsub.f32 %v652, %v653
      %v655 = vmul.f32 %v645, %v654
      %v656 = vadd.f32 %v650, %v655
      %v657 = vmul.f32 %v572, 2.0
      %v658 = vmul.f32 %v625, %v657
      %v659 = vmul.f32 %v573, 2.0
      %v660 = vmul.f32 %v659, %v572
      %v661 = vmul.f32 %v635, %v660
      %v662 = vadd.f32 %v658, %v661
      %v663 = vmul.f32 %v573, %v570
      %v664 = vmul.f32 %v570, 3.0
      %v665 = vmul.f32 %v664, %v574
      %v666 = vsub.f32 %v663, %v665
      %v667 = vmul.f32 %v645, %v666
      %v668 = vadd.f32 %v662, %v667
      %v669 = vmul.f32 %v57, %v656
      %v670 = vsub.f32 %v570, %v669
      %v671 = vmul.f32 %v58, %v668
      %v672 = vsub.f32 %v572, %v671
      %v673 = vmul.f32 %v670, %v670
      %v674 = vmul.f32 %v672, %v672
      %v675 = vmul.f32 %v670, %v672
      %v676 = vadd.f32 %v673, %v674
      %v677 = vmul.f32 %v673, %v674
      %v678 = vsub.f32 %v673, %v674
      %v679 = vmul.f32 %v675, %v678
      %v680 = vlaneseq
      %v681 = vshrl.u32 %v680, 7
      %v682 = vsub.s32 0, %v681
      %v683 = vrot.slane %v676, %v682
      %v684 = vmul.f32 %v683, %v73
      %v685 = vlaneseq
      %v686 = vshrl.u32 %v685, 7
      %v687 = vsub.s32 0, %v686
      %v688 = vrot.slane %v677, %v687
      %v689 = vmul.f32 %v688, %v82
      %v690 = vadd.f32 %v684, %v689
      %v691 = vlaneseq
      %v692 = vshrl.u32 %v691, 7
      %v693 = vsub.s32 0, %v692
      %v694 = vrot.slane %v679, %v693
      %v695 = vmul.f32 %v694, %v92
      %v696 = vadd.f32 %v690, %v695
      %v697 = vsel %vm96, %v696, -inf
      %v698 = vrot.slane %v697, 4
      %v699 = vmax.f32 %v697, %v698
      %v700 = vrot.slane %v699, 2
      %v701 = vmax.f32 %v699, %v700
      %v702 = vrot.slane %v701, 1
      %v703 = vmax.f32 %v701, %v702
      %v704 = vsub.f32 %v696, %v703
      %v705 = vmul.f32 %v704, 1.442695
      %v706 = vpow.pop %v705
      %v707 = vsel %vm96, %v706, 0.0
      %v708 = vrot.slane %v707, 4
      %v709 = vadd.f32 %v707, %v708
      %v710 = vrot.slane %v709, 2
      %v711 = vadd.f32 %v709, %v710
      %v712 = vrot.slane %v711, 1
      %v713 = vadd.f32 %v711, %v712
      %v714 = vrcp.pop %v713
      %v715 = vmul.f32 1.0, %v714
      %v716 = vmul.f32 %v706, %v73
      %v717 = vsel %vm96, %v716, 0.0
      %v718 = vrot.slane %v717, 4
      %v719 = vadd.f32 %v717, %v718
      %v720 = vrot.slane %v719, 2
      %v721 = vadd.f32 %v719, %v720
      %v722 = vrot.slane %v721, 1
      %v723 = vadd.f32 %v721, %v722
      %v724 = vmul.f32 %v715, %v723
      %v725 = vsub.f32 %v676, %v724
      %v726 = vmul.f32 %v706, %v82
      %v727 = vsel %vm96, %v726, 0.0
      %v728 = vrot.slane %v727, 4
      %v729 = vadd.f32 %v727, %v728
      %v730 = vrot.slane %v729, 2
      %v731 = vadd.f32 %v729, %v730
      %v732 = vrot.slane %v731, 1
      %v733 = vadd.f32 %v731, %v732
      %v734 = vmul.f32 %v715, %v733
      %v735 = vsub.f32 %v677, %v734
      %v736 = vmul.f32 %v706, %v92
      %v737 = vsel %vm96, %v736, 0.0
      %v738 = vrot.slane %v737, 4
      %v739 = vadd.f32 %v737, %v738
      %v740 = vrot.slane %v739, 2
      %v741 = vadd.f32 %v739, %v740
      %v742 = vrot.slane %v741, 1
      %v743 = vadd.f32 %v741, %v742
      %v744 = vmul.f32 %v715, %v743
      %v745 = vsub.f32 %v679, %v744
      %v746 = vmul.f32 %v670, 2.0
      %v747 = vmul.f32 %v725, %v746
      %v748 = vmul.f32 %v746, %v674
      %v749 = vmul.f32 %v735, %v748
      %v750 = vadd.f32 %v747, %v749
      %v751 = vmul.f32 %v673, 3.0
      %v752 = vmul.f32 %v751, %v672
      %v753 = vmul.f32 %v674, %v672
      %v754 = vsub.f32 %v752, %v753
      %v755 = vmul.f32 %v745, %v754
      %v756 = vadd.f32 %v750, %v755
      %v757 = vmul.f32 %v672, 2.0
      %v758 = vmul.f32 %v725, %v757
      %v759 = vmul.f32 %v673, 2.0
      %v760 = vmul.f32 %v759, %v672
      %v761 = vmul.f32 %v735, %v760
      %v762 = vadd.f32 %v758, %v761
      %v763 = vmul.f32 %v673, %v670
      %v764 = vmul.f32 %v670, 3.0
      %v765 = vmul.f32 %v764, %v674
      %v766 = vsub.f32 %v763, %v765
      %v767 = vmul.f32 %v745, %v766
      %v768 = vadd.f32 %v762, %v767
      %v769 = vmul.f32 %v57, %v756
      %v770 = vsub.f32 %v670, %v769
      %v771 = vmul.f32 %v58, %v768
      %v772 = vsub.f32 %v672, %v771
      %v773 = vmul.f32 %v770, %v770
      %v774 = vmul.f32 %v772, %v772
      %v775 = vmul.f32 %v770, %v772
      %v776 = vadd.f32 %v773, %v774
      %v777 = vmul.f32 %v773, %v774
      %v778 = vsub.f32 %v773, %v774
      %v779 = vmul.f32 %v775, %v778
      %v780 = vlaneseq
      %v781 = vshrl.u32 %v780, 7
      %v782 = vsub.s32 0, %v781
      %v783 = vrot.slane %v776, %v782
      %v784 = vmul.f32 %v783, %v73
      %v785 = vlaneseq
      %v786 = vshrl.u32 %v785, 7
      %v787 = vsub.s32 0, %v786
      %v788 = vrot.slane %v777, %v787
      %v789 = vmul.f32 %v788, %v82
      %v790 = vadd.f32 %v784, %v789
      %v791 = vlaneseq
      %v792 = vshrl.u32 %v791, 7
      %v793 = vsub.s32 0, %v792
      %v794 = vrot.slane %v779, %v793
      %v795 = vmul.f32 %v794, %v92
      %v796 = vadd.f32 %v790, %v795
      %v797 = vsel %vm96, %v796, -inf
      %v798 = vrot.slane %v797, 4
      %v799 = vmax.f32 %v797, %v798
      %v800 = vrot.slane %v799, 2
      %v801 = vmax.f32 %v799, %v800
      %v802 = vrot.slane %v801, 1
      %v803 = vmax.f32 %v801, %v802
      %v804 = vsub.f32 %v796, %v803
      %v805 = vmul.f32 %v804, 1.442695
      %v806 = vpow.pop %v805
      %v807 = vsel %vm96, %v806, 0.0
      %v808 = vrot.slane %v807, 4
      %v809 = vadd.f32 %v807, %v808
      %v810 = vrot.slane %v809, 2
      %v811 = vadd.f32 %v809, %v810
      %v812 = vrot.slane %v811, 1
      %v813 = vadd.f32 %v811, %v812
      %v814 = vrcp.pop %v813
      %v815 = vmul.f32 1.0, %v814
      %v816 = vmul.f32 %v806, %v73
      %v817 = vsel %vm96, %v816, 0.0
      %v818 = vrot.slane %v817, 4
      %v819 = vadd.f32 %v817, %v818
      %v820 = vrot.slane %v819, 2
      %v821 = vadd.f32 %v819, %v820
      %v822 = vrot.slane %v821, 1
      %v823 = vadd.f32 %v821, %v822
      %v824 = vmul.f32 %v815, %v823
      %v825 = vsub.f32 %v776, %v824
      %v826 = vmul.f32 %v806, %v82
      %v827 = vsel %vm96, %v826, 0.0
      %v828 = vrot.slane %v827, 4
      %v829 = vadd.f32 %v827, %v828
      %v830 = vrot.slane %v829, 2
      %v831 = vadd.f32 %v829, %v830
      %v832 = vrot.slane %v831, 1
      %v833 = vadd.f32 %v831, %v832
      %v834 = vmul.f32 %v815, %v833
      %v835 = vsub.f32 %v777, %v834
      %v836 = vmul.f32 %v806, %v92
      %v837 = vsel %vm96, %v836, 0.0
      %v838 = vrot.slane %v837, 4
      %v839 = vadd.f32 %v837, %v838
      %v840 = vrot.slane %v839, 2
      %v841 = vadd.f32 %v839, %v840
      %v842 = vrot.slane %v841, 1
      %v843 = vadd.f32 %v841, %v842
      %v844 = vmul.f32 %v815, %v843
      %v845 = vsub.f32 %v779, %v844
      %v846 = vmul.f32 %v770, 2.0
      %v847 = vmul.f32 %v825, %v846
      %v848 = vmul.f32 %v846, %v774
      %v849 = vmul.f32 %v835, %v848
      %v850 = vadd.f32 %v847, %v849
      %v851 = vmul.f32 %v773, 3.0
      %v852 = vmul.f32 %v851, %v772
      %v853 = vmul.f32 %v774, %v772
      %v854 = vsub.f32 %v852, %v853
      %v855 = vmul.f32 %v845, %v854
      %v856 = vadd.f32 %v850, %v855
      %v857 = vmul.f32 %v772, 2.0
      %v858 = vmul.f32 %v825, %v857
      %v859 = vmul.f32 %v773, 2.0
      %v860 = vmul.f32 %v859, %v772
      %v861 = vmul.f32 %v835, %v860
      %v862 = vadd.f32 %v858, %v861
      %v863 = vmul.f32 %v773, %v770
      %v864 = vmul.f32 %v770, 3.0
      %v865 = vmul.f32 %v864, %v774
      %v866 = vsub.f32 %v863, %v865
      %v867 = vmul.f32 %v845, %v866
      %v868 = vadd.f32 %v862, %v867
      %v869 = vmul.f32 %v57, %v856
      %v870 = vsub.f32 %v770, %v869
      %v871 = vmul.f32 %v58, %v868
      %v872 = vsub.f32 %v772, %v871
      %v873 = vsub.f32 %v870, %v770
      %v874 = vand.u32 2147483647, %v873
      %v875 = vsub.f32 %v872, %v772
      %v876 = vand.u32 2147483647, %v875
      %v877 = vmax.f32 %v874, %v876
      %vm878 = vcmask 1040384
      %v879 = vsel %vm878, %v877, -inf
      %880 = vmax.xlane.f32.xlu0 %v879
      %v881 = vpop.xlane.xlu0 %880
      %v882 = vrot.slane %v881, 4
      %v883 = vmax.f32 %v881, %v882
      %v884 = vrot.slane %v883, 2
      %v885 = vmax.f32 %v883, %v884
      %v886 = vrot.slane %v885, 1
      %v887 = vmax.f32 %v885, %v886
      %s888 = vtos %v887
      %p889 = scmp.lt.f32.partialorder %s888, 1e-06
      %s890 = scalar_select %p889, 1, 0
      %s891 = scvt.s32.f32 %s890
      %s892 = smax.f32 %s54, %s891
    $region26: #{tpu_custom_call.1} parent=1 // loop_footer
      %s51 = sadd.s32 1, %s47
    $region27: #{tpu_custom_call.1} parent=1 // loop_footer_branch
      %46 = sbr.rel target = $region23
    $region28: #{tpu_custom_call.1} parent=1 // loop_exit
      _
    %893 = vst [vmem:[#allocation7] sm:$0x1] %v52
    %894 = vst [vmem:[#allocation7 + $0x1] sm:$0x1] %v53
    // Predicated region
    $region29: #{tpu_custom_call.1} parent=1 // pred_check
      _
    $region30: #{tpu_custom_call.1} parent=1 // pred_check_branch
      %896 = sbr.rel (0) target = $region32
    $region31: #{tpu_custom_call.1} parent=1 // pred_region
      %s898 = ssub.s32 32, 32
      %899 = vsyncadd [#allocation4], %s898
      %s901 = sshll.u32 [#allocation7], 4
      %s902 = int_to_ptr.vmem [resolvable:$true] %s901
      %904 = dma.vmem_to_hbm [thread:$0]  %s902, 32, %s3, [#allocation4]
    $region32: #{tpu_custom_call.1} parent=1 // pred_fallthru
      _
    // Predicated region
    $region33: #{tpu_custom_call.1} parent=1 // pred_check
      _
    $region34: #{tpu_custom_call.1} parent=1 // pred_check_branch
      %906 = sbr.rel (0) target = $region36
    $region35: #{tpu_custom_call.1} parent=1 // pred_region
      %907 = dma.done [#allocation4], 32
    $region36: #{tpu_custom_call.1} parent=1 // pred_fallthru
      _
    %908 = vsyncpa [#allocation3], 1
    %909 = vsyncpa [#allocation6], 1
    %910 = vsyncpa [#allocation4], 1

</llo_original>
